<compile_context>
chip_gen: v7x
topology: tpu7x:2x2x1
jax: 0.10.0
libtpu: 0.0.40
codegen_flags: <defaults>
</compile_context>

<pallas_src>
import jax
import jax.numpy as jnp
from jax.experimental import pallas as pl
from jax.experimental.pallas import tpu as pltpu

_LANES = 128  # batch rows packed per lane-dense output row (lane width)


def _affine_kernel(x_ref, w_ref, b_ref, o_ref):
    # x_ref: (nb, F*128) f32 -- 128 batch rows packed per sublane row, fully lane-dense.
    # w_ref: (F*128, 128) f32 -- block-diagonal expansion of the folded weight, resident
    #                            across grid steps (constant index_map).
    # b_ref: (1, 1) f32 SMEM  -- folded bias scalar.
    # o_ref: (nb, 128) f32    -- lane-dense output (unmasked vst), row r of group g is
    #                            y for batch row g*128 + r.
    acc = jnp.dot(
        x_ref[...], w_ref[...],
        precision=jax.lax.Precision.HIGHEST,       # keep f32-accurate MXU passes
        preferred_element_type=jnp.float32,
    )
    o_ref[...] = (acc + b_ref[0, 0]).astype(o_ref.dtype)


def fold_params(w1, b1, w2, b2):
    """Fold the two linear layers once (hoisted out of the per-forward path).

    Weights are stored transposed vs. nn.Linear: w1 (5,16), b1 (1,16), w2 (16,1),
    b2 (1,1).  Returns (w_exp, b_fold) where
      w_exp[k, r] = w_fold[k % 5] if k // 5 == r else 0   (shape (5*128, 128))
    so that reshape(x, (B/128, 640)) @ w_exp recovers x @ w_fold per batch row.
    """
    w_fold = (w1 @ w2).reshape(-1).astype(jnp.float32)          # (F,)
    b_fold = (b1 @ w2 + b2).reshape(1, 1).astype(jnp.float32)   # (1,1)
    F = w_fold.shape[0]
    # kron(eye(128), w_fold[:,None]) places w_fold on the k//F == r "block diagonal".
    w_exp = jnp.kron(jnp.eye(_LANES, dtype=jnp.float32), w_fold.reshape(F, 1))
    return w_exp, b_fold


def net_forward(x, folded, *, nb_max=2048, min_pallas_batch=1024,
                vmem_limit_bytes=32 * 1024 * 1024):
    """Forward of Net (two stacked linears == one affine map).

    `folded` comes from fold_params(...).  nb_max is the number of 128-row groups
    per grid step (2048 -> 256K batch rows / ~6 MB HBM per step, ~13 MiB VMEM).
    """
    w_exp, b_fold = folded
    K, R = w_exp.shape              # (F*128, 128)
    F = K // R
    B = x.shape[0]
    assert x.shape[1] == F
    x = x.astype(jnp.float32)

    if B < min_pallas_batch:
        # Tiny batches: a single fused XLA affine beats any kernel-launch overhead.
        w_col = w_exp[:F, :1]       # recover the folded (F,1) weight column
        return x @ w_col + b_fold

    # Pack 128 batch rows per lane-dense row: (B,F) -> (B/128, F*128).  This is a
    # free row-major reshape when B % 128 == 0; otherwise pad the ragged tail
    # (one extra copy -- large-B callers should pass B as a multiple of 128).
    G = pl.cdiv(B, R)
    b_pad = G * R
    if b_pad != B:
        x = jnp.pad(x, ((0, b_pad - B), (0, 0)))
    xr = x.reshape(G, K)

    # Tile over 128-row groups; keep nb a multiple of 8 (sublane) unless it covers
    # the whole array.  Partial edge blocks are handled by Pallas (OOB writes dropped).
    nb_max = max(8, (nb_max // 8) * 8)
    nb = G if G <= nb_max else nb_max
    grid = (pl.cdiv(G, nb),)

    out = pl.pallas_call(
        _affine_kernel,
        out_shape=jax.ShapeDtypeStruct((G, R), jnp.float32),
        grid=grid,
        in_specs=[
            pl.BlockSpec((nb, K), lambda i: (i, 0)),             # streamed x tiles
            pl.BlockSpec((K, R), lambda i: (0, 0)),              # constant idx -> resident weight
            pl.BlockSpec(memory_space=pltpu.MemorySpace.SMEM),   # bias scalar in SMEM
        ],
        out_specs=pl.BlockSpec((nb, R), lambda i: (i, 0)),
        compiler_params=pltpu.CompilerParams(
            dimension_semantics=("parallel",),   # shards the 1-D grid across 2 TCs on v7x
            vmem_limit_bytes=vmem_limit_bytes,   # explicit: v5e default scoped VMEM is 16 MiB
        ),
    )(xr, w_exp, b_fold)

    # (G,128) -> (b_pad,1) is a free row-major reshape; slice off padded rows.
    return out.reshape(b_pad, 1)[:B]


def init_params(key):
    # Deterministic init mimicking nn.Linear shapes:
    #   dense1: weight (16, 5), bias (16)  -> stored transposed as (5, 16)
    #   dense2: weight (1, 16), bias (1)   -> stored transposed as (16, 1)
    k1, k2, k3, k4 = jax.random.split(key, 4)
    lim1 = 1.0 / jnp.sqrt(5.0)
    lim2 = 1.0 / jnp.sqrt(16.0)
    w1 = jax.random.uniform(k1, (5, 16), jnp.float32, -lim1, lim1)
    b1 = jax.random.uniform(k2, (1, 16), jnp.float32, -lim1, lim1)
    w2 = jax.random.uniform(k3, (16, 1), jnp.float32, -lim2, lim2)
    b2 = jax.random.uniform(k4, (1, 1), jnp.float32, -lim2, lim2)
    return w1, b1, w2, b2


if __name__ == "__main__":
    key = jax.random.PRNGKey(0)
    kx, kp = jax.random.split(key)
    w1, b1, w2, b2 = init_params(kp)
    folded = fold_params(w1, b1, w2, b2)   # hoisted: fold once, reuse across calls

    def ref_fn(xx):
        return (xx @ w1 + b1) @ w2 + b2

    # 1) Small batch, force the Pallas path (single grid step, 8 rows padded to 128).
    B = 8
    x = jax.random.normal(kx, (B, 5), jnp.float32)
    y = net_forward(x, folded, min_pallas_batch=0)
    jax.block_until_ready(y)
    assert y.shape == (B, 1)
    assert jnp.allclose(y, ref_fn(x), atol=1e-4, rtol=1e-4)

    # 2) Multi-step grid + ragged tail: G=11 groups of 128 rows, nb=8 -> 2 grid steps
    #    with a partial edge block (exercises pipelining and OOB-write masking).
    B2 = 1300
    x2 = jax.random.normal(jax.random.PRNGKey(1), (B2, 5), jnp.float32)
    y2 = net_forward(x2, folded, nb_max=8, min_pallas_batch=0)
    jax.block_until_ready(y2)
    assert y2.shape == (B2, 1)
    assert jnp.allclose(y2, ref_fn(x2), atol=1e-4, rtol=1e-4)

    # 3) Tiny-batch fast path (skips Pallas entirely).
    B3 = 16
    x3 = jax.random.normal(jax.random.PRNGKey(2), (B3, 5), jnp.float32)
    y3 = net_forward(x3, folded)
    jax.block_until_ready(y3)
    assert jnp.allclose(y3, ref_fn(x3), atol=1e-4, rtol=1e-4)

    print("KERNEL_OK")
</pallas_src>

<mosaic_0001>
module attributes {stable_mosaic.version = 11 : i64} {
  func.func @_affine_kernel(%arg0: i32, %arg1: memref<1x640xf32, #tpu.memory_space<vmem>>, %arg2: memref<640x128xf32, #tpu.memory_space<vmem>>, %arg3: memref<1x1xf32, #tpu.memory_space<smem>>, %arg4: memref<1x128xf32, #tpu.memory_space<vmem>>) attributes {dimension_semantics = [#tpu.dimension_semantics<parallel>], iteration_bounds = array<i64: 1>, scalar_prefetch = 0 : i64, scratch_operands = 0 : i64, tpu.core_type = #tpu.core_type<tc>, window_params = [{transform_indices = @transform_0, window_bounds = array<i64: 1, 640>}, {pipeline_mode = #tpu.pipeline_mode<synchronous>, transform_indices = @transform_1, window_bounds = array<i64: 640, 128>}, {transform_indices = @transform_2, window_bounds = array<i64: 1, 1>}, {transform_indices = @transform_3, window_bounds = array<i64: 1, 128>}]} {
    %c0 = arith.constant 0 : index
    %c0_0 = arith.constant 0 : index
    %0 = vector.load %arg1[%c0, %c0_0] : memref<1x640xf32, #tpu.memory_space<vmem>>, vector<1x640xf32>
    %c0_1 = arith.constant 0 : index
    %c0_2 = arith.constant 0 : index
    %1 = vector.load %arg2[%c0_1, %c0_2] : memref<640x128xf32, #tpu.memory_space<vmem>>, vector<640x128xf32>
    %cst = arith.constant dense<0.000000e+00> : vector<1x128xf32>
    %2 = tpu.matmul %0, %1, %cst {dimension_numbers = #tpu.dot_dimension_numbers<[1], [0], [0], [1], [0, 0, 1, 1], [], []>, precision = #tpu.contract_precision<fp32>} : vector<1x640xf32>, vector<640x128xf32>, vector<1x128xf32> -> vector<1x128xf32>
    %c0_3 = arith.constant 0 : index
    %c0_4 = arith.constant 0 : index
    %3 = memref.load %arg3[%c0_3, %c0_4] : memref<1x1xf32, #tpu.memory_space<smem>>
    %4 = vector.broadcast %3 : f32 to vector<1x128xf32>
    %5 = arith.addf %2, %4 : vector<1x128xf32>
    %c0_5 = arith.constant 0 : index
    %c0_6 = arith.constant 0 : index
    %6 = vector.load %arg4[%c0_5, %c0_6] : memref<1x128xf32, #tpu.memory_space<vmem>>, vector<1x128xf32>
    tpu.vector_store %arg4[%c0_5, %c0_6], %5 {strides = array<i32>} : memref<1x128xf32, #tpu.memory_space<vmem>>, vector<1x128xf32>,
    return
  }
  func.func @transform_0(%arg0: i32) -> (i32, i32) {
    %c0_i32 = arith.constant 0 : i32
    %c0_i32_0 = arith.constant 0 : i32
    return %arg0, %c0_i32 : i32, i32
  }
  func.func @transform_1(%arg0: i32) -> (i32, i32) {
    %c0_i32 = arith.constant 0 : i32
    %c0_i32_0 = arith.constant 0 : i32
    %c0_i32_1 = arith.constant 0 : i32
    return %c0_i32, %c0_i32_0 : i32, i32
  }
  func.func @transform_2(%arg0: i32) -> (i32, i32) {
    %c0_i32 = arith.constant 0 : i32
    %c0_i32_0 = arith.constant 0 : i32
    %c0_i32_1 = arith.constant 0 : i32
    return %c0_i32, %c0_i32_0 : i32, i32
  }
  func.func @transform_3(%arg0: i32) -> (i32, i32) {
    %c0_i32 = arith.constant 0 : i32
    %c0_i32_0 = arith.constant 0 : i32
    return %arg0, %c0_i32 : i32, i32
  }
}

</mosaic_0001>

<llo_original>
// kernel: tpu_custom_call.1
$region0: #{tpu_custom_call.1}
  #allocation0 [shape = 'u32[]', space=smem, size = 0x4, offset = 0x4, fixed_abs, tag = 'smem constant byte address 0x4 - core index']
  #allocation1 [shape = 'u32[144,128]{1,0:T(1,128)}', space=vmem, size = 0x12000, scoped, tag = 'internal scratch']
  #allocation2 [shape = 'f32[1,1]{1,0:T(1,128)S(6)}', space=smem, size = 0x200, scoped, tag = 'scoped memory for tpu_custom_call.1']
  %s0 = inlined_call_operand.hbm [shape: f32[1,640], index: 0, kind: input, shape index: {}]
  %s1 = inlined_call_operand.hbm [shape: f32[640,128], index: 1, kind: input, shape index: {}]
  %s2 = inlined_call_operand.<no memory space> [shape: f32[1,1], index: 2, kind: input, shape index: {}]
  %s3 = inlined_call_operand.hbm [shape: f32[1,128], index: 3, kind: output, shape index: {}]
  %s4 = sld [smem:[#allocation0]]
  $region30: #{tpu_custom_call.1} parent=0
    _
  %s6 = ssub.s32 1, %s4
  %s7 = scalar_select 0, %s6, %s4
  %8 = sst [smem:[#allocation2]] %s2
  $region1: #{tpu_custom_call.1} parent=0
    #allocation3 [shape = 'u8[2560]{0}', space=vmem, size = 0xc00, scoped, tag = 'input window, operand 0, single buffered']
    #allocation4 [shape = 's32[1]{0}', space=sflag, size = 0x4, scoped, tag = 'scoped memory for tpu_custom_call.1']
    #allocation5 [shape = 's32[1]{0}', space=sflag, size = 0x4, scoped, tag = 'scoped memory for tpu_custom_call.1']
    #allocation6 [shape = 'u8[327680]{0}', space=vmem, size = 0x50000, scoped, tag = 'input window, operand 1, single buffered']
    #allocation7 [shape = 's32[1]{0}', space=sflag, size = 0x4, scoped, tag = 'scoped memory for tpu_custom_call.1']
    #allocation8 [shape = 'u8[512]{0}', space=vmem, size = 0x400, scoped, tag = 'output window, operand 0, single buffered']
    %9 = vsyncpa [#allocation4], 0
    %10 = vsyncpa [#allocation7], 0
    %11 = vsyncpa [#allocation5], 0
    // Predicated region
    $region2: #{tpu_custom_call.1} parent=1 // pred_check
      _
    $region3: #{tpu_custom_call.1} parent=1 // pred_check_branch
      %13 = sbr.rel (0) target = $region5
    $region4: #{tpu_custom_call.1} parent=1 // pred_region
      %s15 = ssub.s32 80, 80
      %16 = vsyncadd [#allocation4], %s15
      %s18 = sshll.u32 [#allocation3], 4
      %s19 = int_to_ptr.vmem [resolvable:$true] %s18
      %21 = dma.hbm_to_vmem [thread:$0]  %s0, 80, %s19, [#allocation4]
    $region5: #{tpu_custom_call.1} parent=1 // pred_fallthru
      _
    // Predicated region
    $region6: #{tpu_custom_call.1} parent=1 // pred_check
      _
    $region7: #{tpu_custom_call.1} parent=1 // pred_check_branch
      %23 = sbr.rel (0) target = $region9
    $region8: #{tpu_custom_call.1} parent=1 // pred_region
      %s25 = ssub.s32 10240, 10240
      %26 = vsyncadd [#allocation7], %s25
      %s27 = sshll.u32 [#allocation6], 4
      %s28 = int_to_ptr.vmem [resolvable:$true] %s27
      %33 = dma.hbm_to_vmem [thread:$0]  %s1, 10240, %s28, [#allocation7], 128, 128, 8
    $region9: #{tpu_custom_call.1} parent=1 // pred_fallthru
      _
    // Predicated region
    $region10: #{tpu_custom_call.1} parent=1 // pred_check
      _
    $region11: #{tpu_custom_call.1} parent=1 // pred_check_branch
      %35 = sbr.rel (0) target = $region13
    $region12: #{tpu_custom_call.1} parent=1 // pred_region
      _
    $region13: #{tpu_custom_call.1} parent=1 // pred_fallthru
      _
    // Predicated region
    $region14: #{tpu_custom_call.1} parent=1 // pred_check
      _
    $region15: #{tpu_custom_call.1} parent=1 // pred_check_branch
      %37 = sbr.rel (0) target = $region17
    $region16: #{tpu_custom_call.1} parent=1 // pred_region
      %38 = dma.done [#allocation4], 80
    $region17: #{tpu_custom_call.1} parent=1 // pred_fallthru
      _
    // Predicated region
    $region18: #{tpu_custom_call.1} parent=1 // pred_check
      _
    $region19: #{tpu_custom_call.1} parent=1 // pred_check_branch
      %40 = sbr.rel (0) target = $region21
    $region20: #{tpu_custom_call.1} parent=1 // pred_region
      %41 = dma.done [#allocation7], 10240
    $region21: #{tpu_custom_call.1} parent=1 // pred_fallthru
      _
    %v42 = vld [vmem:[#allocation3] sm:$0x1f]
    %v43 = vld [vmem:[#allocation6] sm:$0xff]
    %v44 = vld [vmem:[#allocation6 + $0x8] sm:$0xff]
    %v45 = vld [vmem:[#allocation6 + $0x10] sm:$0xff]
    %v46 = vld [vmem:[#allocation6 + $0x18] sm:$0xff]
    %v47 = vld [vmem:[#allocation6 + $0x20] sm:$0xff]
    %v48 = vld [vmem:[#allocation6 + $0x28] sm:$0xff]
    %v49 = vld [vmem:[#allocation6 + $0x30] sm:$0xff]
    %v50 = vld [vmem:[#allocation6 + $0x38] sm:$0xff]
    %v51 = vld [vmem:[#allocation6 + $0x40] sm:$0xff]
    %v52 = vld [vmem:[#allocation6 + $0x48] sm:$0xff]
    %v53 = vld [vmem:[#allocation6 + $0x50] sm:$0xff]
    %v54 = vld [vmem:[#allocation6 + $0x58] sm:$0xff]
    %v55 = vld [vmem:[#allocation6 + $0x60] sm:$0xff]
    %v56 = vld [vmem:[#allocation6 + $0x68] sm:$0xff]
    %v57 = vld [vmem:[#allocation6 + $0x70] sm:$0xff]
    %v58 = vld [vmem:[#allocation6 + $0x78] sm:$0xff]
    %v59 = vld [vmem:[#allocation6 + $0x80] sm:$0xff]
    %v60 = vld [vmem:[#allocation6 + $0x88] sm:$0xff]
    %v61 = vld [vmem:[#allocation6 + $0x90] sm:$0xff]
    %v62 = vld [vmem:[#allocation6 + $0x98] sm:$0xff]
    %v63 = vld [vmem:[#allocation6 + $0xa0] sm:$0xff]
    %v64 = vld [vmem:[#allocation6 + $0xa8] sm:$0xff]
    %v65 = vld [vmem:[#allocation6 + $0xb0] sm:$0xff]
    %v66 = vld [vmem:[#allocation6 + $0xb8] sm:$0xff]
    %v67 = vld [vmem:[#allocation6 + $0xc0] sm:$0xff]
    %v68 = vld [vmem:[#allocation6 + $0xc8] sm:$0xff]
    %v69 = vld [vmem:[#allocation6 + $0xd0] sm:$0xff]
    %v70 = vld [vmem:[#allocation6 + $0xd8] sm:$0xff]
    %v71 = vld [vmem:[#allocation6 + $0xe0] sm:$0xff]
    %v72 = vld [vmem:[#allocation6 + $0xe8] sm:$0xff]
    %v73 = vld [vmem:[#allocation6 + $0xf0] sm:$0xff]
    %v74 = vld [vmem:[#allocation6 + $0xf8] sm:$0xff]
    %v75 = vld [vmem:[#allocation6 + $0x100] sm:$0xff]
    %v76 = vld [vmem:[#allocation6 + $0x108] sm:$0xff]
    %v77 = vld [vmem:[#allocation6 + $0x110] sm:$0xff]
    %v78 = vld [vmem:[#allocation6 + $0x118] sm:$0xff]
    %v79 = vld [vmem:[#allocation6 + $0x120] sm:$0xff]
    %v80 = vld [vmem:[#allocation6 + $0x128] sm:$0xff]
    %v81 = vld [vmem:[#allocation6 + $0x130] sm:$0xff]
    %v82 = vld [vmem:[#allocation6 + $0x138] sm:$0xff]
    %v83 = vld [vmem:[#allocation6 + $0x140] sm:$0xff]
    %v84 = vld [vmem:[#allocation6 + $0x148] sm:$0xff]
    %v85 = vld [vmem:[#allocation6 + $0x150] sm:$0xff]
    %v86 = vld [vmem:[#allocation6 + $0x158] sm:$0xff]
    %v87 = vld [vmem:[#allocation6 + $0x160] sm:$0xff]
    %v88 = vld [vmem:[#allocation6 + $0x168] sm:$0xff]
    %v89 = vld [vmem:[#allocation6 + $0x170] sm:$0xff]
    %v90 = vld [vmem:[#allocation6 + $0x178] sm:$0xff]
    %v91 = vld [vmem:[#allocation6 + $0x180] sm:$0xff]
    %v92 = vld [vmem:[#allocation6 + $0x188] sm:$0xff]
    %v93 = vld [vmem:[#allocation6 + $0x190] sm:$0xff]
    %v94 = vld [vmem:[#allocation6 + $0x198] sm:$0xff]
    %v95 = vld [vmem:[#allocation6 + $0x1a0] sm:$0xff]
    %v96 = vld [vmem:[#allocation6 + $0x1a8] sm:$0xff]
    %v97 = vld [vmem:[#allocation6 + $0x1b0] sm:$0xff]
    %v98 = vld [vmem:[#allocation6 + $0x1b8] sm:$0xff]
    %v99 = vld [vmem:[#allocation6 + $0x1c0] sm:$0xff]
    %v100 = vld [vmem:[#allocation6 + $0x1c8] sm:$0xff]
    %v101 = vld [vmem:[#allocation6 + $0x1d0] sm:$0xff]
    %v102 = vld [vmem:[#allocation6 + $0x1d8] sm:$0xff]
    %v103 = vld [vmem:[#allocation6 + $0x1e0] sm:$0xff]
    %v104 = vld [vmem:[#allocation6 + $0x1e8] sm:$0xff]
    %v105 = vld [vmem:[#allocation6 + $0x1f0] sm:$0xff]
    %v106 = vld [vmem:[#allocation6 + $0x1f8] sm:$0xff]
    %v107 = vld [vmem:[#allocation6 + $0x200] sm:$0xff]
    %v108 = vld [vmem:[#allocation6 + $0x208] sm:$0xff]
    %v109 = vld [vmem:[#allocation6 + $0x210] sm:$0xff]
    %v110 = vld [vmem:[#allocation6 + $0x218] sm:$0xff]
    %v111 = vld [vmem:[#allocation6 + $0x220] sm:$0xff]
    %v112 = vld [vmem:[#allocation6 + $0x228] sm:$0xff]
    %v113 = vld [vmem:[#allocation6 + $0x230] sm:$0xff]
    %v114 = vld [vmem:[#allocation6 + $0x238] sm:$0xff]
    %v115 = vld [vmem:[#allocation6 + $0x240] sm:$0xff]
    %v116 = vld [vmem:[#allocation6 + $0x248] sm:$0xff]
    %v117 = vld [vmem:[#allocation6 + $0x250] sm:$0xff]
    %v118 = vld [vmem:[#allocation6 + $0x258] sm:$0xff]
    %v119 = vld [vmem:[#allocation6 + $0x260] sm:$0xff]
    %v120 = vld [vmem:[#allocation6 + $0x268] sm:$0xff]
    %v121 = vld [vmem:[#allocation6 + $0x270] sm:$0xff]
    %v122 = vld [vmem:[#allocation6 + $0x278] sm:$0xff]
    %s123 = sld [smem:[#allocation2]]
    %v124 = vstv %s123
    %v126 = vlaneseq
    %v127 = vshrl.u32 %v126, 7
    %v128 = vsub.s32 0, %v127
    %v129 = vrot.slane %v42, %v128
    %v130 = vlaneseq
    %v131 = vshrl.u32 %v130, 7
    %v132 = vsub.s32 1, %v131
    %v133 = vrot.slane %v42, %v132
    %v134 = vlaneseq
    %v135 = vshrl.u32 %v134, 7
    %v136 = vsub.s32 2, %v135
    %v137 = vrot.slane %v42, %v136
    %v138 = vlaneseq
    %v139 = vshrl.u32 %v138, 7
    %v140 = vsub.s32 3, %v139
    %v141 = vrot.slane %v42, %v140
    %v142 = vlaneseq
    %v143 = vshrl.u32 %v142, 7
    %v144 = vsub.s32 4, %v143
    %v145 = vrot.slane %v42, %v144
    %151 = vmatprep.subr.mxu0 0.0
    %v152 = vand.u32 %v43, 4294901760
    %153 = vmatpush1.msra.mxu0 %v152
    %154 = vmatprep.subr.mxu0 0.0
    %v155 = vand.u32 %v44, 4294901760
    %156 = vmatpush1.msra.mxu0 %v155
    %157 = vmatprep.subr.mxu0 0.0
    %v158 = vand.u32 %v45, 4294901760
    %159 = vmatpush1.msra.mxu0 %v158
    %160 = vmatprep.subr.mxu0 0.0
    %v161 = vand.u32 %v46, 4294901760
    %162 = vmatpush1.msra.mxu0 %v161
    %163 = vmatprep.subr.mxu0 0.0
    %v164 = vand.u32 %v47, 4294901760
    %165 = vmatpush1.msra.mxu0 %v164
    %166 = vmatprep.subr.mxu0 0.0
    %v167 = vand.u32 %v48, 4294901760
    %168 = vmatpush1.msra.mxu0 %v167
    %169 = vmatprep.subr.mxu0 0.0
    %v170 = vand.u32 %v49, 4294901760
    %171 = vmatpush1.msra.mxu0 %v170
    %172 = vmatprep.subr.mxu0 0.0
    %v173 = vand.u32 %v50, 4294901760
    %174 = vmatpush1.msra.mxu0 %v173
    %175 = vmatprep.subr.mxu0 0.0
    %v176 = vand.u32 %v51, 4294901760
    %177 = vmatpush1.msra.mxu0 %v176
    %178 = vmatprep.subr.mxu0 0.0
    %v179 = vand.u32 %v52, 4294901760
    %180 = vmatpush1.msra.mxu0 %v179
    %181 = vmatprep.subr.mxu0 0.0
    %v182 = vand.u32 %v53, 4294901760
    %183 = vmatpush1.msra.mxu0 %v182
    %184 = vmatprep.subr.mxu0 0.0
    %v185 = vand.u32 %v54, 4294901760
    %186 = vmatpush1.msra.mxu0 %v185
    %187 = vmatprep.subr.mxu0 0.0
    %v188 = vand.u32 %v55, 4294901760
    %189 = vmatpush1.msra.mxu0 %v188
    %190 = vmatprep.subr.mxu0 0.0
    %v191 = vand.u32 %v56, 4294901760
    %192 = vmatpush1.msra.mxu0 %v191
    %193 = vmatprep.subr.mxu0 0.0
    %v194 = vand.u32 %v57, 4294901760
    %195 = vmatpush1.msra.mxu0 %v194
    %196 = vmatprep.subr.mxu0 0.0
    %v197 = vand.u32 %v58, 4294901760
    %198 = vmatpush1.msra.mxu0 %v197
    %199 = vmatprep.subr.mxu0 0.0
    %v200 = vand.u32 %v59, 4294901760
    %201 = vmatpush1.msra.mxu0 %v200
    %202 = vmatprep.subr.mxu0 0.0
    %v203 = vand.u32 %v60, 4294901760
    %204 = vmatpush1.msra.mxu0 %v203
    %205 = vmatprep.subr.mxu0 0.0
    %v206 = vand.u32 %v61, 4294901760
    %207 = vmatpush1.msra.mxu0 %v206
    %208 = vmatprep.subr.mxu0 0.0
    %v209 = vand.u32 %v62, 4294901760
    %210 = vmatpush1.msra.mxu0 %v209
    %211 = vmatprep.subr.mxu0 0.0
    %v212 = vand.u32 %v63, 4294901760
    %213 = vmatpush1.msra.mxu0 %v212
    %214 = vmatprep.subr.mxu0 0.0
    %v215 = vand.u32 %v64, 4294901760
    %216 = vmatpush1.msra.mxu0 %v215
    %217 = vmatprep.subr.mxu0 0.0
    %v218 = vand.u32 %v65, 4294901760
    %219 = vmatpush1.msra.mxu0 %v218
    %220 = vmatprep.subr.mxu0 0.0
    %v221 = vand.u32 %v66, 4294901760
    %222 = vmatpush1.msra.mxu0 %v221
    %223 = vmatprep.subr.mxu0 0.0
    %v224 = vand.u32 %v67, 4294901760
    %225 = vmatpush1.msra.mxu0 %v224
    %226 = vmatprep.subr.mxu0 0.0
    %v227 = vand.u32 %v68, 4294901760
    %228 = vmatpush1.msra.mxu0 %v227
    %229 = vmatprep.subr.mxu0 0.0
    %v230 = vand.u32 %v69, 4294901760
    %231 = vmatpush1.msra.mxu0 %v230
    %232 = vmatprep.subr.mxu0 0.0
    %v233 = vand.u32 %v70, 4294901760
    %234 = vmatpush1.msra.mxu0 %v233
    %235 = vmatprep.subr.mxu0 0.0
    %v236 = vand.u32 %v71, 4294901760
    %237 = vmatpush1.msra.mxu0 %v236
    %238 = vmatprep.subr.mxu0 0.0
    %v239 = vand.u32 %v72, 4294901760
    %240 = vmatpush1.msra.mxu0 %v239
    %241 = vmatprep.subr.mxu0 0.0
    %v242 = vand.u32 %v73, 4294901760
    %243 = vmatpush1.msra.mxu0 %v242
    %244 = vmatprep.subr.mxu0 0.0
    %v245 = vand.u32 %v74, 4294901760
    %246 = vmatpush1.msra.mxu0 %v245
    %v247 = vand.u32 %v133, 4294901760
    %v248 = vsub.f32 %v133, %v247
    %v249 = vand.u32 %v248, 4294901760
    %v250 = vsub.f32 %v248, %v249
    %v251 = vand.u32 %v250, 4294901760
    %252 = vmatprep.mubr.f32.mxu0 %v251
    %v253 = vand.u32 %v129, 4294901760
    %v254 = vsub.f32 %v129, %v253
    %v255 = vand.u32 %v254, 4294901760
    %v256 = vsub.f32 %v254, %v255
    %v257 = vand.u32 %v256, 4294901760
    %258 = vmatmul.mubr.f32.gmra.mrb[0].mxu0 %v257
    %v259 = vpop.f32.mrb[0].mxu0
    %v260 = vadd.f32 %v124, %v259
    %v261 = vpop.f32.mrb[0].mxu0
    %262 = vdwg.mxu0
    %263 = vmatprep.subr.mxu0 0.0
    %v264 = vand.u32 %v43, 4294901760
    %v265 = vsub.f32 %v43, %v264
    %v266 = vand.u32 %v265, 4294901760
    %v267 = vsub.f32 %v265, %v266
    %v268 = vand.u32 %v267, 4294901760
    %269 = vmatpush1.msra.mxu0 %v268
    %270 = vmatprep.subr.mxu0 0.0
    %v271 = vand.u32 %v44, 4294901760
    %v272 = vsub.f32 %v44, %v271
    %v273 = vand.u32 %v272, 4294901760
    %v274 = vsub.f32 %v272, %v273
    %v275 = vand.u32 %v274, 4294901760
    %276 = vmatpush1.msra.mxu0 %v275
    %277 = vmatprep.subr.mxu0 0.0
    %v278 = vand.u32 %v45, 4294901760
    %v279 = vsub.f32 %v45, %v278
    %v280 = vand.u32 %v279, 4294901760
    %v281 = vsub.f32 %v279, %v280
    %v282 = vand.u32 %v281, 4294901760
    %283 = vmatpush1.msra.mxu0 %v282
    %284 = vmatprep.subr.mxu0 0.0
    %v285 = vand.u32 %v46, 4294901760
    %v286 = vsub.f32 %v46, %v285
    %v287 = vand.u32 %v286, 4294901760
    %v288 = vsub.f32 %v286, %v287
    %v289 = vand.u32 %v288, 4294901760
    %290 = vmatpush1.msra.mxu0 %v289
    %291 = vmatprep.subr.mxu0 0.0
    %v292 = vand.u32 %v47, 4294901760
    %v293 = vsub.f32 %v47, %v292
    %v294 = vand.u32 %v293, 4294901760
    %v295 = vsub.f32 %v293, %v294
    %v296 = vand.u32 %v295, 4294901760
    %297 = vmatpush1.msra.mxu0 %v296
    %298 = vmatprep.subr.mxu0 0.0
    %v299 = vand.u32 %v48, 4294901760
    %v300 = vsub.f32 %v48, %v299
    %v301 = vand.u32 %v300, 4294901760
    %v302 = vsub.f32 %v300, %v301
    %v303 = vand.u32 %v302, 4294901760
    %304 = vmatpush1.msra.mxu0 %v303
    %305 = vmatprep.subr.mxu0 0.0
    %v306 = vand.u32 %v49, 4294901760
    %v307 = vsub.f32 %v49, %v306
    %v308 = vand.u32 %v307, 4294901760
    %v309 = vsub.f32 %v307, %v308
    %v310 = vand.u32 %v309, 4294901760
    %311 = vmatpush1.msra.mxu0 %v310
    %312 = vmatprep.subr.mxu0 0.0
    %v313 = vand.u32 %v50, 4294901760
    %v314 = vsub.f32 %v50, %v313
    %v315 = vand.u32 %v314, 4294901760
    %v316 = vsub.f32 %v314, %v315
    %v317 = vand.u32 %v316, 4294901760
    %318 = vmatpush1.msra.mxu0 %v317
    %319 = vmatprep.subr.mxu0 0.0
    %v320 = vand.u32 %v51, 4294901760
    %v321 = vsub.f32 %v51, %v320
    %v322 = vand.u32 %v321, 4294901760
    %v323 = vsub.f32 %v321, %v322
    %v324 = vand.u32 %v323, 4294901760
    %325 = vmatpush1.msra.mxu0 %v324
    %326 = vmatprep.subr.mxu0 0.0
    %v327 = vand.u32 %v52, 4294901760
    %v328 = vsub.f32 %v52, %v327
    %v329 = vand.u32 %v328, 4294901760
    %v330 = vsub.f32 %v328, %v329
    %v331 = vand.u32 %v330, 4294901760
    %332 = vmatpush1.msra.mxu0 %v331
    %333 = vmatprep.subr.mxu0 0.0
    %v334 = vand.u32 %v53, 4294901760
    %v335 = vsub.f32 %v53, %v334
    %v336 = vand.u32 %v335, 4294901760
    %v337 = vsub.f32 %v335, %v336
    %v338 = vand.u32 %v337, 4294901760
    %339 = vmatpush1.msra.mxu0 %v338
    %340 = vmatprep.subr.mxu0 0.0
    %v341 = vand.u32 %v54, 4294901760
    %v342 = vsub.f32 %v54, %v341
    %v343 = vand.u32 %v342, 4294901760
    %v344 = vsub.f32 %v342, %v343
    %v345 = vand.u32 %v344, 4294901760
    %346 = vmatpush1.msra.mxu0 %v345
    %347 = vmatprep.subr.mxu0 0.0
    %v348 = vand.u32 %v55, 4294901760
    %v349 = vsub.f32 %v55, %v348
    %v350 = vand.u32 %v349, 4294901760
    %v351 = vsub.f32 %v349, %v350
    %v352 = vand.u32 %v351, 4294901760
    %353 = vmatpush1.msra.mxu0 %v352
    %354 = vmatprep.subr.mxu0 0.0
    %v355 = vand.u32 %v56, 4294901760
    %v356 = vsub.f32 %v56, %v355
    %v357 = vand.u32 %v356, 4294901760
    %v358 = vsub.f32 %v356, %v357
    %v359 = vand.u32 %v358, 4294901760
    %360 = vmatpush1.msra.mxu0 %v359
    %361 = vmatprep.subr.mxu0 0.0
    %v362 = vand.u32 %v57, 4294901760
    %v363 = vsub.f32 %v57, %v362
    %v364 = vand.u32 %v363, 4294901760
    %v365 = vsub.f32 %v363, %v364
    %v366 = vand.u32 %v365, 4294901760
    %367 = vmatpush1.msra.mxu0 %v366
    %368 = vmatprep.subr.mxu0 0.0
    %v369 = vand.u32 %v58, 4294901760
    %v370 = vsub.f32 %v58, %v369
    %v371 = vand.u32 %v370, 4294901760
    %v372 = vsub.f32 %v370, %v371
    %v373 = vand.u32 %v372, 4294901760
    %374 = vmatpush1.msra.mxu0 %v373
    %375 = vmatprep.subr.mxu0 0.0
    %v376 = vand.u32 %v59, 4294901760
    %v377 = vsub.f32 %v59, %v376
    %v378 = vand.u32 %v377, 4294901760
    %v379 = vsub.f32 %v377, %v378
    %v380 = vand.u32 %v379, 4294901760
    %381 = vmatpush1.msra.mxu0 %v380
    %382 = vmatprep.subr.mxu0 0.0
    %v383 = vand.u32 %v60, 4294901760
    %v384 = vsub.f32 %v60, %v383
    %v385 = vand.u32 %v384, 4294901760
    %v386 = vsub.f32 %v384, %v385
    %v387 = vand.u32 %v386, 4294901760
    %388 = vmatpush1.msra.mxu0 %v387
    %389 = vmatprep.subr.mxu0 0.0
    %v390 = vand.u32 %v61, 4294901760
    %v391 = vsub.f32 %v61, %v390
    %v392 = vand.u32 %v391, 4294901760
    %v393 = vsub.f32 %v391, %v392
    %v394 = vand.u32 %v393, 4294901760
    %395 = vmatpush1.msra.mxu0 %v394
    %396 = vmatprep.subr.mxu0 0.0
    %v397 = vand.u32 %v62, 4294901760
    %v398 = vsub.f32 %v62, %v397
    %v399 = vand.u32 %v398, 4294901760
    %v400 = vsub.f32 %v398, %v399
    %v401 = vand.u32 %v400, 4294901760
    %402 = vmatpush1.msra.mxu0 %v401
    %403 = vmatprep.subr.mxu0 0.0
    %v404 = vand.u32 %v63, 4294901760
    %v405 = vsub.f32 %v63, %v404
    %v406 = vand.u32 %v405, 4294901760
    %v407 = vsub.f32 %v405, %v406
    %v408 = vand.u32 %v407, 4294901760
    %409 = vmatpush1.msra.mxu0 %v408
    %410 = vmatprep.subr.mxu0 0.0
    %v411 = vand.u32 %v64, 4294901760
    %v412 = vsub.f32 %v64, %v411
    %v413 = vand.u32 %v412, 4294901760
    %v414 = vsub.f32 %v412, %v413
    %v415 = vand.u32 %v414, 4294901760
    %416 = vmatpush1.msra.mxu0 %v415
    %417 = vmatprep.subr.mxu0 0.0
    %v418 = vand.u32 %v65, 4294901760
    %v419 = vsub.f32 %v65, %v418
    %v420 = vand.u32 %v419, 4294901760
    %v421 = vsub.f32 %v419, %v420
    %v422 = vand.u32 %v421, 4294901760
    %423 = vmatpush1.msra.mxu0 %v422
    %424 = vmatprep.subr.mxu0 0.0
    %v425 = vand.u32 %v66, 4294901760
    %v426 = vsub.f32 %v66, %v425
    %v427 = vand.u32 %v426, 4294901760
    %v428 = vsub.f32 %v426, %v427
    %v429 = vand.u32 %v428, 4294901760
    %430 = vmatpush1.msra.mxu0 %v429
    %431 = vmatprep.subr.mxu0 0.0
    %v432 = vand.u32 %v67, 4294901760
    %v433 = vsub.f32 %v67, %v432
    %v434 = vand.u32 %v433, 4294901760
    %v435 = vsub.f32 %v433, %v434
    %v436 = vand.u32 %v435, 4294901760
    %437 = vmatpush1.msra.mxu0 %v436
    %438 = vmatprep.subr.mxu0 0.0
    %v439 = vand.u32 %v68, 4294901760
    %v440 = vsub.f32 %v68, %v439
    %v441 = vand.u32 %v440, 4294901760
    %v442 = vsub.f32 %v440, %v441
    %v443 = vand.u32 %v442, 4294901760
    %444 = vmatpush1.msra.mxu0 %v443
    %445 = vmatprep.subr.mxu0 0.0
    %v446 = vand.u32 %v69, 4294901760
    %v447 = vsub.f32 %v69, %v446
    %v448 = vand.u32 %v447, 4294901760
    %v449 = vsub.f32 %v447, %v448
    %v450 = vand.u32 %v449, 4294901760
    %451 = vmatpush1.msra.mxu0 %v450
    %452 = vmatprep.subr.mxu0 0.0
    %v453 = vand.u32 %v70, 4294901760
    %v454 = vsub.f32 %v70, %v453
    %v455 = vand.u32 %v454, 4294901760
    %v456 = vsub.f32 %v454, %v455
    %v457 = vand.u32 %v456, 4294901760
    %458 = vmatpush1.msra.mxu0 %v457
    %459 = vmatprep.subr.mxu0 0.0
    %v460 = vand.u32 %v71, 4294901760
    %v461 = vsub.f32 %v71, %v460
    %v462 = vand.u32 %v461, 4294901760
    %v463 = vsub.f32 %v461, %v462
    %v464 = vand.u32 %v463, 4294901760
    %465 = vmatpush1.msra.mxu0 %v464
    %466 = vmatprep.subr.mxu0 0.0
    %v467 = vand.u32 %v72, 4294901760
    %v468 = vsub.f32 %v72, %v467
    %v469 = vand.u32 %v468, 4294901760
    %v470 = vsub.f32 %v468, %v469
    %v471 = vand.u32 %v470, 4294901760
    %472 = vmatpush1.msra.mxu0 %v471
    %473 = vmatprep.subr.mxu0 0.0
    %v474 = vand.u32 %v73, 4294901760
    %v475 = vsub.f32 %v73, %v474
    %v476 = vand.u32 %v475, 4294901760
    %v477 = vsub.f32 %v475, %v476
    %v478 = vand.u32 %v477, 4294901760
    %479 = vmatpush1.msra.mxu0 %v478
    %480 = vmatprep.subr.mxu0 0.0
    %v481 = vand.u32 %v74, 4294901760
    %v482 = vsub.f32 %v74, %v481
    %v483 = vand.u32 %v482, 4294901760
    %v484 = vsub.f32 %v482, %v483
    %v485 = vand.u32 %v484, 4294901760
    %486 = vmatpush1.msra.mxu0 %v485
    %v487 = vand.u32 %v133, 4294901760
    %488 = vmatprep.mubr.f32.mxu0 %v487
    %v489 = vand.u32 %v129, 4294901760
    %490 = vmatmul.mubr.f32.gmra.mrb[0].mxu0 %v489
    %v491 = vpop.f32.mrb[0].mxu0
    %v492 = vadd.f32 %v260, %v491
    %v493 = vpop.f32.mrb[0].mxu0
    %494 = vdwg.mxu0
    %495 = vmatprep.subr.mxu0 0.0
    %v496 = vand.u32 %v43, 4294901760
    %v497 = vsub.f32 %v43, %v496
    %498 = vmatpush1.msra.mxu0 %v497
    %499 = vmatprep.subr.mxu0 0.0
    %v500 = vand.u32 %v44, 4294901760
    %v501 = vsub.f32 %v44, %v500
    %502 = vmatpush1.msra.mxu0 %v501
    %503 = vmatprep.subr.mxu0 0.0
    %v504 = vand.u32 %v45, 4294901760
    %v505 = vsub.f32 %v45, %v504
    %506 = vmatpush1.msra.mxu0 %v505
    %507 = vmatprep.subr.mxu0 0.0
    %v508 = vand.u32 %v46, 4294901760
    %v509 = vsub.f32 %v46, %v508
    %510 = vmatpush1.msra.mxu0 %v509
    %511 = vmatprep.subr.mxu0 0.0
    %v512 = vand.u32 %v47, 4294901760
    %v513 = vsub.f32 %v47, %v512
    %514 = vmatpush1.msra.mxu0 %v513
    %515 = vmatprep.subr.mxu0 0.0
    %v516 = vand.u32 %v48, 4294901760
    %v517 = vsub.f32 %v48, %v516
    %518 = vmatpush1.msra.mxu0 %v517
    %519 = vmatprep.subr.mxu0 0.0
    %v520 = vand.u32 %v49, 4294901760
    %v521 = vsub.f32 %v49, %v520
    %522 = vmatpush1.msra.mxu0 %v521
    %523 = vmatprep.subr.mxu0 0.0
    %v524 = vand.u32 %v50, 4294901760
    %v525 = vsub.f32 %v50, %v524
    %526 = vmatpush1.msra.mxu0 %v525
    %527 = vmatprep.subr.mxu0 0.0
    %v528 = vand.u32 %v51, 4294901760
    %v529 = vsub.f32 %v51, %v528
    %530 = vmatpush1.msra.mxu0 %v529
    %531 = vmatprep.subr.mxu0 0.0
    %v532 = vand.u32 %v52, 4294901760
    %v533 = vsub.f32 %v52, %v532
    %534 = vmatpush1.msra.mxu0 %v533
    %535 = vmatprep.subr.mxu0 0.0
    %v536 = vand.u32 %v53, 4294901760
    %v537 = vsub.f32 %v53, %v536
    %538 = vmatpush1.msra.mxu0 %v537
    %539 = vmatprep.subr.mxu0 0.0
    %v540 = vand.u32 %v54, 4294901760
    %v541 = vsub.f32 %v54, %v540
    %542 = vmatpush1.msra.mxu0 %v541
    %543 = vmatprep.subr.mxu0 0.0
    %v544 = vand.u32 %v55, 4294901760
    %v545 = vsub.f32 %v55, %v544
    %546 = vmatpush1.msra.mxu0 %v545
    %547 = vmatprep.subr.mxu0 0.0
    %v548 = vand.u32 %v56, 4294901760
    %v549 = vsub.f32 %v56, %v548
    %550 = vmatpush1.msra.mxu0 %v549
    %551 = vmatprep.subr.mxu0 0.0
    %v552 = vand.u32 %v57, 4294901760
    %v553 = vsub.f32 %v57, %v552
    %554 = vmatpush1.msra.mxu0 %v553
    %555 = vmatprep.subr.mxu0 0.0
    %v556 = vand.u32 %v58, 4294901760
    %v557 = vsub.f32 %v58, %v556
    %558 = vmatpush1.msra.mxu0 %v557
    %559 = vmatprep.subr.mxu0 0.0
    %v560 = vand.u32 %v59, 4294901760
    %v561 = vsub.f32 %v59, %v560
    %562 = vmatpush1.msra.mxu0 %v561
    %563 = vmatprep.subr.mxu0 0.0
    %v564 = vand.u32 %v60, 4294901760
    %v565 = vsub.f32 %v60, %v564
    %566 = vmatpush1.msra.mxu0 %v565
    %567 = vmatprep.subr.mxu0 0.0
    %v568 = vand.u32 %v61, 4294901760
    %v569 = vsub.f32 %v61, %v568
    %570 = vmatpush1.msra.mxu0 %v569
    %571 = vmatprep.subr.mxu0 0.0
    %v572 = vand.u32 %v62, 4294901760
    %v573 = vsub.f32 %v62, %v572
    %574 = vmatpush1.msra.mxu0 %v573
    %575 = vmatprep.subr.mxu0 0.0
    %v576 = vand.u32 %v63, 4294901760
    %v577 = vsub.f32 %v63, %v576
    %578 = vmatpush1.msra.mxu0 %v577
    %579 = vmatprep.subr.mxu0 0.0
    %v580 = vand.u32 %v64, 4294901760
    %v581 = vsub.f32 %v64, %v580
    %582 = vmatpush1.msra.mxu0 %v581
    %583 = vmatprep.subr.mxu0 0.0
    %v584 = vand.u32 %v65, 4294901760
    %v585 = vsub.f32 %v65, %v584
    %586 = vmatpush1.msra.mxu0 %v585
    %587 = vmatprep.subr.mxu0 0.0
    %v588 = vand.u32 %v66, 4294901760
    %v589 = vsub.f32 %v66, %v588
    %590 = vmatpush1.msra.mxu0 %v589
    %591 = vmatprep.subr.mxu0 0.0
    %v592 = vand.u32 %v67, 4294901760
    %v593 = vsub.f32 %v67, %v592
    %594 = vmatpush1.msra.mxu0 %v593
    %595 = vmatprep.subr.mxu0 0.0
    %v596 = vand.u32 %v68, 4294901760
    %v597 = vsub.f32 %v68, %v596
    %598 = vmatpush1.msra.mxu0 %v597
    %599 = vmatprep.subr.mxu0 0.0
    %v600 = vand.u32 %v69, 4294901760
    %v601 = vsub.f32 %v69, %v600
    %602 = vmatpush1.msra.mxu0 %v601
    %603 = vmatprep.subr.mxu0 0.0
    %v604 = vand.u32 %v70, 4294901760
    %v605 = vsub.f32 %v70, %v604
    %606 = vmatpush1.msra.mxu0 %v605
    %607 = vmatprep.subr.mxu0 0.0
    %v608 = vand.u32 %v71, 4294901760
    %v609 = vsub.f32 %v71, %v608
    %610 = vmatpush1.msra.mxu0 %v609
    %611 = vmatprep.subr.mxu0 0.0
    %v612 = vand.u32 %v72, 4294901760
    %v613 = vsub.f32 %v72, %v612
    %614 = vmatpush1.msra.mxu0 %v613
    %615 = vmatprep.subr.mxu0 0.0
    %v616 = vand.u32 %v73, 4294901760
    %v617 = vsub.f32 %v73, %v616
    %618 = vmatpush1.msra.mxu0 %v617
    %619 = vmatprep.subr.mxu0 0.0
    %v620 = vand.u32 %v74, 4294901760
    %v621 = vsub.f32 %v74, %v620
    %622 = vmatpush1.msra.mxu0 %v621
    %v623 = vand.u32 %v133, 4294901760
    %v624 = vsub.f32 %v133, %v623
    %625 = vmatprep.mubr.f32.mxu0 %v624
    %v626 = vand.u32 %v129, 4294901760
    %v627 = vsub.f32 %v129, %v626
    %628 = vmatmul.mubr.f32.gmra.mrb[0].mxu0 %v627
    %v629 = vpop.f32.mrb[0].mxu0
    %v630 = vadd.f32 %v492, %v629
    %v631 = vpop.f32.mrb[0].mxu0
    %632 = vdwg.mxu0
    %633 = vmatprep.subr.mxu0 0.0
    %v634 = vand.u32 %v43, 4294901760
    %635 = vmatpush1.msra.mxu0 %v634
    %636 = vmatprep.subr.mxu0 0.0
    %v637 = vand.u32 %v44, 4294901760
    %638 = vmatpush1.msra.mxu0 %v637
    %639 = vmatprep.subr.mxu0 0.0
    %v640 = vand.u32 %v45, 4294901760
    %641 = vmatpush1.msra.mxu0 %v640
    %642 = vmatprep.subr.mxu0 0.0
    %v643 = vand.u32 %v46, 4294901760
    %644 = vmatpush1.msra.mxu0 %v643
    %645 = vmatprep.subr.mxu0 0.0
    %v646 = vand.u32 %v47, 4294901760
    %647 = vmatpush1.msra.mxu0 %v646
    %648 = vmatprep.subr.mxu0 0.0
    %v649 = vand.u32 %v48, 4294901760
    %650 = vmatpush1.msra.mxu0 %v649
    %651 = vmatprep.subr.mxu0 0.0
    %v652 = vand.u32 %v49, 4294901760
    %653 = vmatpush1.msra.mxu0 %v652
    %654 = vmatprep.subr.mxu0 0.0
    %v655 = vand.u32 %v50, 4294901760
    %656 = vmatpush1.msra.mxu0 %v655
    %657 = vmatprep.subr.mxu0 0.0
    %v658 = vand.u32 %v51, 4294901760
    %659 = vmatpush1.msra.mxu0 %v658
    %660 = vmatprep.subr.mxu0 0.0
    %v661 = vand.u32 %v52, 4294901760
    %662 = vmatpush1.msra.mxu0 %v661
    %663 = vmatprep.subr.mxu0 0.0
    %v664 = vand.u32 %v53, 4294901760
    %665 = vmatpush1.msra.mxu0 %v664
    %666 = vmatprep.subr.mxu0 0.0
    %v667 = vand.u32 %v54, 4294901760
    %668 = vmatpush1.msra.mxu0 %v667
    %669 = vmatprep.subr.mxu0 0.0
    %v670 = vand.u32 %v55, 4294901760
    %671 = vmatpush1.msra.mxu0 %v670
    %672 = vmatprep.subr.mxu0 0.0
    %v673 = vand.u32 %v56, 4294901760
    %674 = vmatpush1.msra.mxu0 %v673
    %675 = vmatprep.subr.mxu0 0.0
    %v676 = vand.u32 %v57, 4294901760
    %677 = vmatpush1.msra.mxu0 %v676
    %678 = vmatprep.subr.mxu0 0.0
    %v679 = vand.u32 %v58, 4294901760
    %680 = vmatpush1.msra.mxu0 %v679
    %681 = vmatprep.subr.mxu0 0.0
    %v682 = vand.u32 %v59, 4294901760
    %683 = vmatpush1.msra.mxu0 %v682
    %684 = vmatprep.subr.mxu0 0.0
    %v685 = vand.u32 %v60, 4294901760
    %686 = vmatpush1.msra.mxu0 %v685
    %687 = vmatprep.subr.mxu0 0.0
    %v688 = vand.u32 %v61, 4294901760
    %689 = vmatpush1.msra.mxu0 %v688
    %690 = vmatprep.subr.mxu0 0.0
    %v691 = vand.u32 %v62, 4294901760
    %692 = vmatpush1.msra.mxu0 %v691
    %693 = vmatprep.subr.mxu0 0.0
    %v694 = vand.u32 %v63, 4294901760
    %695 = vmatpush1.msra.mxu0 %v694
    %696 = vmatprep.subr.mxu0 0.0
    %v697 = vand.u32 %v64, 4294901760
    %698 = vmatpush1.msra.mxu0 %v697
    %699 = vmatprep.subr.mxu0 0.0
    %v700 = vand.u32 %v65, 4294901760
    %701 = vmatpush1.msra.mxu0 %v700
    %702 = vmatprep.subr.mxu0 0.0
    %v703 = vand.u32 %v66, 4294901760
    %704 = vmatpush1.msra.mxu0 %v703
    %705 = vmatprep.subr.mxu0 0.0
    %v706 = vand.u32 %v67, 4294901760
    %707 = vmatpush1.msra.mxu0 %v706
    %708 = vmatprep.subr.mxu0 0.0
    %v709 = vand.u32 %v68, 4294901760
    %710 = vmatpush1.msra.mxu0 %v709
    %711 = vmatprep.subr.mxu0 0.0
    %v712 = vand.u32 %v69, 4294901760
    %713 = vmatpush1.msra.mxu0 %v712
    %714 = vmatprep.subr.mxu0 0.0
    %v715 = vand.u32 %v70, 4294901760
    %716 = vmatpush1.msra.mxu0 %v715
    %717 = vmatprep.subr.mxu0 0.0
    %v718 = vand.u32 %v71, 4294901760
    %719 = vmatpush1.msra.mxu0 %v718
    %720 = vmatprep.subr.mxu0 0.0
    %v721 = vand.u32 %v72, 4294901760
    %722 = vmatpush1.msra.mxu0 %v721
    %723 = vmatprep.subr.mxu0 0.0
    %v724 = vand.u32 %v73, 4294901760
    %725 = vmatpush1.msra.mxu0 %v724
    %726 = vmatprep.subr.mxu0 0.0
    %v727 = vand.u32 %v74, 4294901760
    %728 = vmatpush1.msra.mxu0 %v727
    %v729 = vand.u32 %v133, 4294901760
    %v730 = vsub.f32 %v133, %v729
    %v731 = vand.u32 %v730, 4294901760
    %732 = vmatprep.mubr.f32.mxu0 %v731
    %v733 = vand.u32 %v129, 4294901760
    %v734 = vsub.f32 %v129, %v733
    %v735 = vand.u32 %v734, 4294901760
    %736 = vmatmul.mubr.f32.gmra.mrb[0].mxu0 %v735
    %v737 = vpop.f32.mrb[0].mxu0
    %v738 = vadd.f32 %v630, %v737
    %v739 = vpop.f32.mrb[0].mxu0
    %740 = vdwg.mxu0
    %741 = vmatprep.subr.mxu0 0.0
    %v742 = vand.u32 %v43, 4294901760
    %v743 = vsub.f32 %v43, %v742
    %v744 = vand.u32 %v743, 4294901760
    %745 = vmatpush1.msra.mxu0 %v744
    %746 = vmatprep.subr.mxu0 0.0
    %v747 = vand.u32 %v44, 4294901760
    %v748 = vsub.f32 %v44, %v747
    %v749 = vand.u32 %v748, 4294901760
    %750 = vmatpush1.msra.mxu0 %v749
    %751 = vmatprep.subr.mxu0 0.0
    %v752 = vand.u32 %v45, 4294901760
    %v753 = vsub.f32 %v45, %v752
    %v754 = vand.u32 %v753, 4294901760
    %755 = vmatpush1.msra.mxu0 %v754
    %756 = vmatprep.subr.mxu0 0.0
    %v757 = vand.u32 %v46, 4294901760
    %v758 = vsub.f32 %v46, %v757
    %v759 = vand.u32 %v758, 4294901760
    %760 = vmatpush1.msra.mxu0 %v759
    %761 = vmatprep.subr.mxu0 0.0
    %v762 = vand.u32 %v47, 4294901760
    %v763 = vsub.f32 %v47, %v762
    %v764 = vand.u32 %v763, 4294901760
    %765 = vmatpush1.msra.mxu0 %v764
    %766 = vmatprep.subr.mxu0 0.0
    %v767 = vand.u32 %v48, 4294901760
    %v768 = vsub.f32 %v48, %v767
    %v769 = vand.u32 %v768, 4294901760
    %770 = vmatpush1.msra.mxu0 %v769
    %771 = vmatprep.subr.mxu0 0.0
    %v772 = vand.u32 %v49, 4294901760
    %v773 = vsub.f32 %v49, %v772
    %v774 = vand.u32 %v773, 4294901760
    %775 = vmatpush1.msra.mxu0 %v774
    %776 = vmatprep.subr.mxu0 0.0
    %v777 = vand.u32 %v50, 4294901760
    %v778 = vsub.f32 %v50, %v777
    %v779 = vand.u32 %v778, 4294901760
    %780 = vmatpush1.msra.mxu0 %v779
    %781 = vmatprep.subr.mxu0 0.0
    %v782 = vand.u32 %v51, 4294901760
    %v783 = vsub.f32 %v51, %v782
    %v784 = vand.u32 %v783, 4294901760
    %785 = vmatpush1.msra.mxu0 %v784
    %786 = vmatprep.subr.mxu0 0.0
    %v787 = vand.u32 %v52, 4294901760
    %v788 = vsub.f32 %v52, %v787
    %v789 = vand.u32 %v788, 4294901760
    %790 = vmatpush1.msra.mxu0 %v789
    %791 = vmatprep.subr.mxu0 0.0
    %v792 = vand.u32 %v53, 4294901760
    %v793 = vsub.f32 %v53, %v792
    %v794 = vand.u32 %v793, 4294901760
    %795 = vmatpush1.msra.mxu0 %v794
    %796 = vmatprep.subr.mxu0 0.0
    %v797 = vand.u32 %v54, 4294901760
    %v798 = vsub.f32 %v54, %v797
    %v799 = vand.u32 %v798, 4294901760
    %800 = vmatpush1.msra.mxu0 %v799
    %801 = vmatprep.subr.mxu0 0.0
    %v802 = vand.u32 %v55, 4294901760
    %v803 = vsub.f32 %v55, %v802
    %v804 = vand.u32 %v803, 4294901760
    %805 = vmatpush1.msra.mxu0 %v804
    %806 = vmatprep.subr.mxu0 0.0
    %v807 = vand.u32 %v56, 4294901760
    %v808 = vsub.f32 %v56, %v807
    %v809 = vand.u32 %v808, 4294901760
    %810 = vmatpush1.msra.mxu0 %v809
    %811 = vmatprep.subr.mxu0 0.0
    %v812 = vand.u32 %v57, 4294901760
    %v813 = vsub.f32 %v57, %v812
    %v814 = vand.u32 %v813, 4294901760
    %815 = vmatpush1.msra.mxu0 %v814
    %816 = vmatprep.subr.mxu0 0.0
    %v817 = vand.u32 %v58, 4294901760
    %v818 = vsub.f32 %v58, %v817
    %v819 = vand.u32 %v818, 4294901760
    %820 = vmatpush1.msra.mxu0 %v819
    %821 = vmatprep.subr.mxu0 0.0
    %v822 = vand.u32 %v59, 4294901760
    %v823 = vsub.f32 %v59, %v822
    %v824 = vand.u32 %v823, 4294901760
    %825 = vmatpush1.msra.mxu0 %v824
    %826 = vmatprep.subr.mxu0 0.0
    %v827 = vand.u32 %v60, 4294901760
    %v828 = vsub.f32 %v60, %v827
    %v829 = vand.u32 %v828, 4294901760
    %830 = vmatpush1.msra.mxu0 %v829
    %831 = vmatprep.subr.mxu0 0.0
    %v832 = vand.u32 %v61, 4294901760
    %v833 = vsub.f32 %v61, %v832
    %v834 = vand.u32 %v833, 4294901760
    %835 = vmatpush1.msra.mxu0 %v834
    %836 = vmatprep.subr.mxu0 0.0
    %v837 = vand.u32 %v62, 4294901760
    %v838 = vsub.f32 %v62, %v837
    %v839 = vand.u32 %v838, 4294901760
    %840 = vmatpush1.msra.mxu0 %v839
    %841 = vmatprep.subr.mxu0 0.0
    %v842 = vand.u32 %v63, 4294901760
    %v843 = vsub.f32 %v63, %v842
    %v844 = vand.u32 %v843, 4294901760
    %845 = vmatpush1.msra.mxu0 %v844
    %846 = vmatprep.subr.mxu0 0.0
    %v847 = vand.u32 %v64, 4294901760
    %v848 = vsub.f32 %v64, %v847
    %v849 = vand.u32 %v848, 4294901760
    %850 = vmatpush1.msra.mxu0 %v849
    %851 = vmatprep.subr.mxu0 0.0
    %v852 = vand.u32 %v65, 4294901760
    %v853 = vsub.f32 %v65, %v852
    %v854 = vand.u32 %v853, 4294901760
    %855 = vmatpush1.msra.mxu0 %v854
    %856 = vmatprep.subr.mxu0 0.0
    %v857 = vand.u32 %v66, 4294901760
    %v858 = vsub.f32 %v66, %v857
    %v859 = vand.u32 %v858, 4294901760
    %860 = vmatpush1.msra.mxu0 %v859
    %861 = vmatprep.subr.mxu0 0.0
    %v862 = vand.u32 %v67, 4294901760
    %v863 = vsub.f32 %v67, %v862
    %v864 = vand.u32 %v863, 4294901760
    %865 = vmatpush1.msra.mxu0 %v864
    %866 = vmatprep.subr.mxu0 0.0
    %v867 = vand.u32 %v68, 4294901760
    %v868 = vsub.f32 %v68, %v867
    %v869 = vand.u32 %v868, 4294901760
    %870 = vmatpush1.msra.mxu0 %v869
    %871 = vmatprep.subr.mxu0 0.0
    %v872 = vand.u32 %v69, 4294901760
    %v873 = vsub.f32 %v69, %v872
    %v874 = vand.u32 %v873, 4294901760
    %875 = vmatpush1.msra.mxu0 %v874
    %876 = vmatprep.subr.mxu0 0.0
    %v877 = vand.u32 %v70, 4294901760
    %v878 = vsub.f32 %v70, %v877
    %v879 = vand.u32 %v878, 4294901760
    %880 = vmatpush1.msra.mxu0 %v879
    %881 = vmatprep.subr.mxu0 0.0
    %v882 = vand.u32 %v71, 4294901760
    %v883 = vsub.f32 %v71, %v882
    %v884 = vand.u32 %v883, 4294901760
    %885 = vmatpush1.msra.mxu0 %v884
    %886 = vmatprep.subr.mxu0 0.0
    %v887 = vand.u32 %v72, 4294901760
    %v888 = vsub.f32 %v72, %v887
    %v889 = vand.u32 %v888, 4294901760
    %890 = vmatpush1.msra.mxu0 %v889
    %891 = vmatprep.subr.mxu0 0.0
    %v892 = vand.u32 %v73, 4294901760
    %v893 = vsub.f32 %v73, %v892
    %v894 = vand.u32 %v893, 4294901760
    %895 = vmatpush1.msra.mxu0 %v894
    %896 = vmatprep.subr.mxu0 0.0
    %v897 = vand.u32 %v74, 4294901760
    %v898 = vsub.f32 %v74, %v897
    %v899 = vand.u32 %v898, 4294901760
    %900 = vmatpush1.msra.mxu0 %v899
    %v901 = vand.u32 %v133, 4294901760
    %902 = vmatprep.mubr.f32.mxu0 %v901
    %v903 = vand.u32 %v129, 4294901760
    %904 = vmatmul.mubr.f32.gmra.mrb[0].mxu0 %v903
    %v905 = vpop.f32.mrb[0].mxu0
    %v906 = vadd.f32 %v738, %v905
    %v907 = vpop.f32.mrb[0].mxu0
    %908 = vdwg.mxu0
    %909 = vmatprep.subr.mxu0 0.0
    %v910 = vand.u32 %v43, 4294901760
    %911 = vmatpush1.msra.mxu0 %v910
    %912 = vmatprep.subr.mxu0 0.0
    %v913 = vand.u32 %v44, 4294901760
    %914 = vmatpush1.msra.mxu0 %v913
    %915 = vmatprep.subr.mxu0 0.0
    %v916 = vand.u32 %v45, 4294901760
    %917 = vmatpush1.msra.mxu0 %v916
    %918 = vmatprep.subr.mxu0 0.0
    %v919 = vand.u32 %v46, 4294901760
    %920 = vmatpush1.msra.mxu0 %v919
    %921 = vmatprep.subr.mxu0 0.0
    %v922 = vand.u32 %v47, 4294901760
    %923 = vmatpush1.msra.mxu0 %v922
    %924 = vmatprep.subr.mxu0 0.0
    %v925 = vand.u32 %v48, 4294901760
    %926 = vmatpush1.msra.mxu0 %v925
    %927 = vmatprep.subr.mxu0 0.0
    %v928 = vand.u32 %v49, 4294901760
    %929 = vmatpush1.msra.mxu0 %v928
    %930 = vmatprep.subr.mxu0 0.0
    %v931 = vand.u32 %v50, 4294901760
    %932 = vmatpush1.msra.mxu0 %v931
    %933 = vmatprep.subr.mxu0 0.0
    %v934 = vand.u32 %v51, 4294901760
    %935 = vmatpush1.msra.mxu0 %v934
    %936 = vmatprep.subr.mxu0 0.0
    %v937 = vand.u32 %v52, 4294901760
    %938 = vmatpush1.msra.mxu0 %v937
    %939 = vmatprep.subr.mxu0 0.0
    %v940 = vand.u32 %v53, 4294901760
    %941 = vmatpush1.msra.mxu0 %v940
    %942 = vmatprep.subr.mxu0 0.0
    %v943 = vand.u32 %v54, 4294901760
    %944 = vmatpush1.msra.mxu0 %v943
    %945 = vmatprep.subr.mxu0 0.0
    %v946 = vand.u32 %v55, 4294901760
    %947 = vmatpush1.msra.mxu0 %v946
    %948 = vmatprep.subr.mxu0 0.0
    %v949 = vand.u32 %v56, 4294901760
    %950 = vmatpush1.msra.mxu0 %v949
    %951 = vmatprep.subr.mxu0 0.0
    %v952 = vand.u32 %v57, 4294901760
    %953 = vmatpush1.msra.mxu0 %v952
    %954 = vmatprep.subr.mxu0 0.0
    %v955 = vand.u32 %v58, 4294901760
    %956 = vmatpush1.msra.mxu0 %v955
    %957 = vmatprep.subr.mxu0 0.0
    %v958 = vand.u32 %v59, 4294901760
    %959 = vmatpush1.msra.mxu0 %v958
    %960 = vmatprep.subr.mxu0 0.0
    %v961 = vand.u32 %v60, 4294901760
    %962 = vmatpush1.msra.mxu0 %v961
    %963 = vmatprep.subr.mxu0 0.0
    %v964 = vand.u32 %v61, 4294901760
    %965 = vmatpush1.msra.mxu0 %v964
    %966 = vmatprep.subr.mxu0 0.0
    %v967 = vand.u32 %v62, 4294901760
    %968 = vmatpush1.msra.mxu0 %v967
    %969 = vmatprep.subr.mxu0 0.0
    %v970 = vand.u32 %v63, 4294901760
    %971 = vmatpush1.msra.mxu0 %v970
    %972 = vmatprep.subr.mxu0 0.0
    %v973 = vand.u32 %v64, 4294901760
    %974 = vmatpush1.msra.mxu0 %v973
    %975 = vmatprep.subr.mxu0 0.0
    %v976 = vand.u32 %v65, 4294901760
    %977 = vmatpush1.msra.mxu0 %v976
    %978 = vmatprep.subr.mxu0 0.0
    %v979 = vand.u32 %v66, 4294901760
    %980 = vmatpush1.msra.mxu0 %v979
    %981 = vmatprep.subr.mxu0 0.0
    %v982 = vand.u32 %v67, 4294901760
    %983 = vmatpush1.msra.mxu0 %v982
    %984 = vmatprep.subr.mxu0 0.0
    %v985 = vand.u32 %v68, 4294901760
    %986 = vmatpush1.msra.mxu0 %v985
    %987 = vmatprep.subr.mxu0 0.0
    %v988 = vand.u32 %v69, 4294901760
    %989 = vmatpush1.msra.mxu0 %v988
    %990 = vmatprep.subr.mxu0 0.0
    %v991 = vand.u32 %v70, 4294901760
    %992 = vmatpush1.msra.mxu0 %v991
    %993 = vmatprep.subr.mxu0 0.0
    %v994 = vand.u32 %v71, 4294901760
    %995 = vmatpush1.msra.mxu0 %v994
    %996 = vmatprep.subr.mxu0 0.0
    %v997 = vand.u32 %v72, 4294901760
    %998 = vmatpush1.msra.mxu0 %v997
    %999 = vmatprep.subr.mxu0 0.0
    %v1000 = vand.u32 %v73, 4294901760
    %1001 = vmatpush1.msra.mxu0 %v1000
    %1002 = vmatprep.subr.mxu0 0.0
    %v1003 = vand.u32 %v74, 4294901760
    %1004 = vmatpush1.msra.mxu0 %v1003
    %v1005 = vand.u32 %v133, 4294901760
    %1006 = vmatprep.mubr.f32.mxu0 %v1005
    %v1007 = vand.u32 %v129, 4294901760
    %1008 = vmatmul.mubr.f32.gmra.mrb[0].mxu0 %v1007
    %v1009 = vpop.f32.mrb[0].mxu0
    %v1010 = vadd.f32 %v906, %v1009
    %v1011 = vpop.f32.mrb[0].mxu0
    %1012 = vdwg.mxu0
    %1013 = vmatprep.subr.mxu0 0.0
    %v1014 = vand.u32 %v75, 4294901760
    %1015 = vmatpush1.msra.mxu0 %v1014
    %1016 = vmatprep.subr.mxu0 0.0
    %v1017 = vand.u32 %v76, 4294901760
    %1018 = vmatpush1.msra.mxu0 %v1017
    %1019 = vmatprep.subr.mxu0 0.0
    %v1020 = vand.u32 %v77, 4294901760
    %1021 = vmatpush1.msra.mxu0 %v1020
    %1022 = vmatprep.subr.mxu0 0.0
    %v1023 = vand.u32 %v78, 4294901760
    %1024 = vmatpush1.msra.mxu0 %v1023
    %1025 = vmatprep.subr.mxu0 0.0
    %v1026 = vand.u32 %v79, 4294901760
    %1027 = vmatpush1.msra.mxu0 %v1026
    %1028 = vmatprep.subr.mxu0 0.0
    %v1029 = vand.u32 %v80, 4294901760
    %1030 = vmatpush1.msra.mxu0 %v1029
    %1031 = vmatprep.subr.mxu0 0.0
    %v1032 = vand.u32 %v81, 4294901760
    %1033 = vmatpush1.msra.mxu0 %v1032
    %1034 = vmatprep.subr.mxu0 0.0
    %v1035 = vand.u32 %v82, 4294901760
    %1036 = vmatpush1.msra.mxu0 %v1035
    %1037 = vmatprep.subr.mxu0 0.0
    %v1038 = vand.u32 %v83, 4294901760
    %1039 = vmatpush1.msra.mxu0 %v1038
    %1040 = vmatprep.subr.mxu0 0.0
    %v1041 = vand.u32 %v84, 4294901760
    %1042 = vmatpush1.msra.mxu0 %v1041
    %1043 = vmatprep.subr.mxu0 0.0
    %v1044 = vand.u32 %v85, 4294901760
    %1045 = vmatpush1.msra.mxu0 %v1044
    %1046 = vmatprep.subr.mxu0 0.0
    %v1047 = vand.u32 %v86, 4294901760
    %1048 = vmatpush1.msra.mxu0 %v1047
    %1049 = vmatprep.subr.mxu0 0.0
    %v1050 = vand.u32 %v87, 4294901760
    %1051 = vmatpush1.msra.mxu0 %v1050
    %1052 = vmatprep.subr.mxu0 0.0
    %v1053 = vand.u32 %v88, 4294901760
    %1054 = vmatpush1.msra.mxu0 %v1053
    %1055 = vmatprep.subr.mxu0 0.0
    %v1056 = vand.u32 %v89, 4294901760
    %1057 = vmatpush1.msra.mxu0 %v1056
    %1058 = vmatprep.subr.mxu0 0.0
    %v1059 = vand.u32 %v90, 4294901760
    %1060 = vmatpush1.msra.mxu0 %v1059
    %1061 = vmatprep.subr.mxu0 0.0
    %v1062 = vand.u32 %v91, 4294901760
    %1063 = vmatpush1.msra.mxu0 %v1062
    %1064 = vmatprep.subr.mxu0 0.0
    %v1065 = vand.u32 %v92, 4294901760
    %1066 = vmatpush1.msra.mxu0 %v1065
    %1067 = vmatprep.subr.mxu0 0.0
    %v1068 = vand.u32 %v93, 4294901760
    %1069 = vmatpush1.msra.mxu0 %v1068
    %1070 = vmatprep.subr.mxu0 0.0
    %v1071 = vand.u32 %v94, 4294901760
    %1072 = vmatpush1.msra.mxu0 %v1071
    %1073 = vmatprep.subr.mxu0 0.0
    %v1074 = vand.u32 %v95, 4294901760
    %1075 = vmatpush1.msra.mxu0 %v1074
    %1076 = vmatprep.subr.mxu0 0.0
    %v1077 = vand.u32 %v96, 4294901760
    %1078 = vmatpush1.msra.mxu0 %v1077
    %1079 = vmatprep.subr.mxu0 0.0
    %v1080 = vand.u32 %v97, 4294901760
    %1081 = vmatpush1.msra.mxu0 %v1080
    %1082 = vmatprep.subr.mxu0 0.0
    %v1083 = vand.u32 %v98, 4294901760
    %1084 = vmatpush1.msra.mxu0 %v1083
    %1085 = vmatprep.subr.mxu0 0.0
    %v1086 = vand.u32 %v99, 4294901760
    %1087 = vmatpush1.msra.mxu0 %v1086
    %1088 = vmatprep.subr.mxu0 0.0
    %v1089 = vand.u32 %v100, 4294901760
    %1090 = vmatpush1.msra.mxu0 %v1089
    %1091 = vmatprep.subr.mxu0 0.0
    %v1092 = vand.u32 %v101, 4294901760
    %1093 = vmatpush1.msra.mxu0 %v1092
    %1094 = vmatprep.subr.mxu0 0.0
    %v1095 = vand.u32 %v102, 4294901760
    %1096 = vmatpush1.msra.mxu0 %v1095
    %1097 = vmatprep.subr.mxu0 0.0
    %v1098 = vand.u32 %v103, 4294901760
    %1099 = vmatpush1.msra.mxu0 %v1098
    %1100 = vmatprep.subr.mxu0 0.0
    %v1101 = vand.u32 %v104, 4294901760
    %1102 = vmatpush1.msra.mxu0 %v1101
    %1103 = vmatprep.subr.mxu0 0.0
    %v1104 = vand.u32 %v105, 4294901760
    %1105 = vmatpush1.msra.mxu0 %v1104
    %1106 = vmatprep.subr.mxu0 0.0
    %v1107 = vand.u32 %v106, 4294901760
    %1108 = vmatpush1.msra.mxu0 %v1107
    %v1109 = vand.u32 %v141, 4294901760
    %v1110 = vsub.f32 %v141, %v1109
    %v1111 = vand.u32 %v1110, 4294901760
    %v1112 = vsub.f32 %v1110, %v1111
    %v1113 = vand.u32 %v1112, 4294901760
    %1114 = vmatprep.mubr.f32.mxu0 %v1113
    %v1115 = vand.u32 %v137, 4294901760
    %v1116 = vsub.f32 %v137, %v1115
    %v1117 = vand.u32 %v1116, 4294901760
    %v1118 = vsub.f32 %v1116, %v1117
    %v1119 = vand.u32 %v1118, 4294901760
    %1120 = vmatmul.mubr.f32.gmra.mrb[0].mxu0 %v1119
    %v1121 = vpop.f32.mrb[0].mxu0
    %v1122 = vadd.f32 %v1010, %v1121
    %v1123 = vpop.f32.mrb[0].mxu0
    %1124 = vdwg.mxu0
    %1125 = vmatprep.subr.mxu0 0.0
    %v1126 = vand.u32 %v75, 4294901760
    %v1127 = vsub.f32 %v75, %v1126
    %v1128 = vand.u32 %v1127, 4294901760
    %v1129 = vsub.f32 %v1127, %v1128
    %v1130 = vand.u32 %v1129, 4294901760
    %1131 = vmatpush1.msra.mxu0 %v1130
    %1132 = vmatprep.subr.mxu0 0.0
    %v1133 = vand.u32 %v76, 4294901760
    %v1134 = vsub.f32 %v76, %v1133
    %v1135 = vand.u32 %v1134, 4294901760
    %v1136 = vsub.f32 %v1134, %v1135
    %v1137 = vand.u32 %v1136, 4294901760
    %1138 = vmatpush1.msra.mxu0 %v1137
    %1139 = vmatprep.subr.mxu0 0.0
    %v1140 = vand.u32 %v77, 4294901760
    %v1141 = vsub.f32 %v77, %v1140
    %v1142 = vand.u32 %v1141, 4294901760
    %v1143 = vsub.f32 %v1141, %v1142
    %v1144 = vand.u32 %v1143, 4294901760
    %1145 = vmatpush1.msra.mxu0 %v1144
    %1146 = vmatprep.subr.mxu0 0.0
    %v1147 = vand.u32 %v78, 4294901760
    %v1148 = vsub.f32 %v78, %v1147
    %v1149 = vand.u32 %v1148, 4294901760
    %v1150 = vsub.f32 %v1148, %v1149
    %v1151 = vand.u32 %v1150, 4294901760
    %1152 = vmatpush1.msra.mxu0 %v1151
    %1153 = vmatprep.subr.mxu0 0.0
    %v1154 = vand.u32 %v79, 4294901760
    %v1155 = vsub.f32 %v79, %v1154
    %v1156 = vand.u32 %v1155, 4294901760
    %v1157 = vsub.f32 %v1155, %v1156
    %v1158 = vand.u32 %v1157, 4294901760
    %1159 = vmatpush1.msra.mxu0 %v1158
    %1160 = vmatprep.subr.mxu0 0.0
    %v1161 = vand.u32 %v80, 4294901760
    %v1162 = vsub.f32 %v80, %v1161
    %v1163 = vand.u32 %v1162, 4294901760
    %v1164 = vsub.f32 %v1162, %v1163
    %v1165 = vand.u32 %v1164, 4294901760
    %1166 = vmatpush1.msra.mxu0 %v1165
    %1167 = vmatprep.subr.mxu0 0.0
    %v1168 = vand.u32 %v81, 4294901760
    %v1169 = vsub.f32 %v81, %v1168
    %v1170 = vand.u32 %v1169, 4294901760
    %v1171 = vsub.f32 %v1169, %v1170
    %v1172 = vand.u32 %v1171, 4294901760
    %1173 = vmatpush1.msra.mxu0 %v1172
    %1174 = vmatprep.subr.mxu0 0.0
    %v1175 = vand.u32 %v82, 4294901760
    %v1176 = vsub.f32 %v82, %v1175
    %v1177 = vand.u32 %v1176, 4294901760
    %v1178 = vsub.f32 %v1176, %v1177
    %v1179 = vand.u32 %v1178, 4294901760
    %1180 = vmatpush1.msra.mxu0 %v1179
    %1181 = vmatprep.subr.mxu0 0.0
    %v1182 = vand.u32 %v83, 4294901760
    %v1183 = vsub.f32 %v83, %v1182
    %v1184 = vand.u32 %v1183, 4294901760
    %v1185 = vsub.f32 %v1183, %v1184
    %v1186 = vand.u32 %v1185, 4294901760
    %1187 = vmatpush1.msra.mxu0 %v1186
    %1188 = vmatprep.subr.mxu0 0.0
    %v1189 = vand.u32 %v84, 4294901760
    %v1190 = vsub.f32 %v84, %v1189
    %v1191 = vand.u32 %v1190, 4294901760
    %v1192 = vsub.f32 %v1190, %v1191
    %v1193 = vand.u32 %v1192, 4294901760
    %1194 = vmatpush1.msra.mxu0 %v1193
    %1195 = vmatprep.subr.mxu0 0.0
    %v1196 = vand.u32 %v85, 4294901760
    %v1197 = vsub.f32 %v85, %v1196
    %v1198 = vand.u32 %v1197, 4294901760
    %v1199 = vsub.f32 %v1197, %v1198
    %v1200 = vand.u32 %v1199, 4294901760
    %1201 = vmatpush1.msra.mxu0 %v1200
    %1202 = vmatprep.subr.mxu0 0.0
    %v1203 = vand.u32 %v86, 4294901760
    %v1204 = vsub.f32 %v86, %v1203
    %v1205 = vand.u32 %v1204, 4294901760
    %v1206 = vsub.f32 %v1204, %v1205
    %v1207 = vand.u32 %v1206, 4294901760
    %1208 = vmatpush1.msra.mxu0 %v1207
    %1209 = vmatprep.subr.mxu0 0.0
    %v1210 = vand.u32 %v87, 4294901760
    %v1211 = vsub.f32 %v87, %v1210
    %v1212 = vand.u32 %v1211, 4294901760
    %v1213 = vsub.f32 %v1211, %v1212
    %v1214 = vand.u32 %v1213, 4294901760
    %1215 = vmatpush1.msra.mxu0 %v1214
    %1216 = vmatprep.subr.mxu0 0.0
    %v1217 = vand.u32 %v88, 4294901760
    %v1218 = vsub.f32 %v88, %v1217
    %v1219 = vand.u32 %v1218, 4294901760
    %v1220 = vsub.f32 %v1218, %v1219
    %v1221 = vand.u32 %v1220, 4294901760
    %1222 = vmatpush1.msra.mxu0 %v1221
    %1223 = vmatprep.subr.mxu0 0.0
    %v1224 = vand.u32 %v89, 4294901760
    %v1225 = vsub.f32 %v89, %v1224
    %v1226 = vand.u32 %v1225, 4294901760
    %v1227 = vsub.f32 %v1225, %v1226
    %v1228 = vand.u32 %v1227, 4294901760
    %1229 = vmatpush1.msra.mxu0 %v1228
    %1230 = vmatprep.subr.mxu0 0.0
    %v1231 = vand.u32 %v90, 4294901760
    %v1232 = vsub.f32 %v90, %v1231
    %v1233 = vand.u32 %v1232, 4294901760
    %v1234 = vsub.f32 %v1232, %v1233
    %v1235 = vand.u32 %v1234, 4294901760
    %1236 = vmatpush1.msra.mxu0 %v1235
    %1237 = vmatprep.subr.mxu0 0.0
    %v1238 = vand.u32 %v91, 4294901760
    %v1239 = vsub.f32 %v91, %v1238
    %v1240 = vand.u32 %v1239, 4294901760
    %v1241 = vsub.f32 %v1239, %v1240
    %v1242 = vand.u32 %v1241, 4294901760
    %1243 = vmatpush1.msra.mxu0 %v1242
    %1244 = vmatprep.subr.mxu0 0.0
    %v1245 = vand.u32 %v92, 4294901760
    %v1246 = vsub.f32 %v92, %v1245
    %v1247 = vand.u32 %v1246, 4294901760
    %v1248 = vsub.f32 %v1246, %v1247
    %v1249 = vand.u32 %v1248, 4294901760
    %1250 = vmatpush1.msra.mxu0 %v1249
    %1251 = vmatprep.subr.mxu0 0.0
    %v1252 = vand.u32 %v93, 4294901760
    %v1253 = vsub.f32 %v93, %v1252
    %v1254 = vand.u32 %v1253, 4294901760
    %v1255 = vsub.f32 %v1253, %v1254
    %v1256 = vand.u32 %v1255, 4294901760
    %1257 = vmatpush1.msra.mxu0 %v1256
    %1258 = vmatprep.subr.mxu0 0.0
    %v1259 = vand.u32 %v94, 4294901760
    %v1260 = vsub.f32 %v94, %v1259
    %v1261 = vand.u32 %v1260, 4294901760
    %v1262 = vsub.f32 %v1260, %v1261
    %v1263 = vand.u32 %v1262, 4294901760
    %1264 = vmatpush1.msra.mxu0 %v1263
    %1265 = vmatprep.subr.mxu0 0.0
    %v1266 = vand.u32 %v95, 4294901760
    %v1267 = vsub.f32 %v95, %v1266
    %v1268 = vand.u32 %v1267, 4294901760
    %v1269 = vsub.f32 %v1267, %v1268
    %v1270 = vand.u32 %v1269, 4294901760
    %1271 = vmatpush1.msra.mxu0 %v1270
    %1272 = vmatprep.subr.mxu0 0.0
    %v1273 = vand.u32 %v96, 4294901760
    %v1274 = vsub.f32 %v96, %v1273
    %v1275 = vand.u32 %v1274, 4294901760
    %v1276 = vsub.f32 %v1274, %v1275
    %v1277 = vand.u32 %v1276, 4294901760
    %1278 = vmatpush1.msra.mxu0 %v1277
    %1279 = vmatprep.subr.mxu0 0.0
    %v1280 = vand.u32 %v97, 4294901760
    %v1281 = vsub.f32 %v97, %v1280
    %v1282 = vand.u32 %v1281, 4294901760
    %v1283 = vsub.f32 %v1281, %v1282
    %v1284 = vand.u32 %v1283, 4294901760
    %1285 = vmatpush1.msra.mxu0 %v1284
    %1286 = vmatprep.subr.mxu0 0.0
    %v1287 = vand.u32 %v98, 4294901760
    %v1288 = vsub.f32 %v98, %v1287
    %v1289 = vand.u32 %v1288, 4294901760
    %v1290 = vsub.f32 %v1288, %v1289
    %v1291 = vand.u32 %v1290, 4294901760
    %1292 = vmatpush1.msra.mxu0 %v1291
    %1293 = vmatprep.subr.mxu0 0.0
    %v1294 = vand.u32 %v99, 4294901760
    %v1295 = vsub.f32 %v99, %v1294
    %v1296 = vand.u32 %v1295, 4294901760
    %v1297 = vsub.f32 %v1295, %v1296
    %v1298 = vand.u32 %v1297, 4294901760
    %1299 = vmatpush1.msra.mxu0 %v1298
    %1300 = vmatprep.subr.mxu0 0.0
    %v1301 = vand.u32 %v100, 4294901760
    %v1302 = vsub.f32 %v100, %v1301
    %v1303 = vand.u32 %v1302, 4294901760
    %v1304 = vsub.f32 %v1302, %v1303
    %v1305 = vand.u32 %v1304, 4294901760
    %1306 = vmatpush1.msra.mxu0 %v1305
    %1307 = vmatprep.subr.mxu0 0.0
    %v1308 = vand.u32 %v101, 4294901760
    %v1309 = vsub.f32 %v101, %v1308
    %v1310 = vand.u32 %v1309, 4294901760
    %v1311 = vsub.f32 %v1309, %v1310
    %v1312 = vand.u32 %v1311, 4294901760
    %1313 = vmatpush1.msra.mxu0 %v1312
    %1314 = vmatprep.subr.mxu0 0.0
    %v1315 = vand.u32 %v102, 4294901760
    %v1316 = vsub.f32 %v102, %v1315
    %v1317 = vand.u32 %v1316, 4294901760
    %v1318 = vsub.f32 %v1316, %v1317
    %v1319 = vand.u32 %v1318, 4294901760
    %1320 = vmatpush1.msra.mxu0 %v1319
    %1321 = vmatprep.subr.mxu0 0.0
    %v1322 = vand.u32 %v103, 4294901760
    %v1323 = vsub.f32 %v103, %v1322
    %v1324 = vand.u32 %v1323, 4294901760
    %v1325 = vsub.f32 %v1323, %v1324
    %v1326 = vand.u32 %v1325, 4294901760
    %1327 = vmatpush1.msra.mxu0 %v1326
    %1328 = vmatprep.subr.mxu0 0.0
    %v1329 = vand.u32 %v104, 4294901760
    %v1330 = vsub.f32 %v104, %v1329
    %v1331 = vand.u32 %v1330, 4294901760
    %v1332 = vsub.f32 %v1330, %v1331
    %v1333 = vand.u32 %v1332, 4294901760
    %1334 = vmatpush1.msra.mxu0 %v1333
    %1335 = vmatprep.subr.mxu0 0.0
    %v1336 = vand.u32 %v105, 4294901760
    %v1337 = vsub.f32 %v105, %v1336
    %v1338 = vand.u32 %v1337, 4294901760
    %v1339 = vsub.f32 %v1337, %v1338
    %v1340 = vand.u32 %v1339, 4294901760
    %1341 = vmatpush1.msra.mxu0 %v1340
    %1342 = vmatprep.subr.mxu0 0.0
    %v1343 = vand.u32 %v106, 4294901760
    %v1344 = vsub.f32 %v106, %v1343
    %v1345 = vand.u32 %v1344, 4294901760
    %v1346 = vsub.f32 %v1344, %v1345
    %v1347 = vand.u32 %v1346, 4294901760
    %1348 = vmatpush1.msra.mxu0 %v1347
    %v1349 = vand.u32 %v141, 4294901760
    %1350 = vmatprep.mubr.f32.mxu0 %v1349
    %v1351 = vand.u32 %v137, 4294901760
    %1352 = vmatmul.mubr.f32.gmra.mrb[0].mxu0 %v1351
    %v1353 = vpop.f32.mrb[0].mxu0
    %v1354 = vadd.f32 %v1122, %v1353
    %v1355 = vpop.f32.mrb[0].mxu0
    %1356 = vdwg.mxu0
    %1357 = vmatprep.subr.mxu0 0.0
    %v1358 = vand.u32 %v75, 4294901760
    %v1359 = vsub.f32 %v75, %v1358
    %1360 = vmatpush1.msra.mxu0 %v1359
    %1361 = vmatprep.subr.mxu0 0.0
    %v1362 = vand.u32 %v76, 4294901760
    %v1363 = vsub.f32 %v76, %v1362
    %1364 = vmatpush1.msra.mxu0 %v1363
    %1365 = vmatprep.subr.mxu0 0.0
    %v1366 = vand.u32 %v77, 4294901760
    %v1367 = vsub.f32 %v77, %v1366
    %1368 = vmatpush1.msra.mxu0 %v1367
    %1369 = vmatprep.subr.mxu0 0.0
    %v1370 = vand.u32 %v78, 4294901760
    %v1371 = vsub.f32 %v78, %v1370
    %1372 = vmatpush1.msra.mxu0 %v1371
    %1373 = vmatprep.subr.mxu0 0.0
    %v1374 = vand.u32 %v79, 4294901760
    %v1375 = vsub.f32 %v79, %v1374
    %1376 = vmatpush1.msra.mxu0 %v1375
    %1377 = vmatprep.subr.mxu0 0.0
    %v1378 = vand.u32 %v80, 4294901760
    %v1379 = vsub.f32 %v80, %v1378
    %1380 = vmatpush1.msra.mxu0 %v1379
    %1381 = vmatprep.subr.mxu0 0.0
    %v1382 = vand.u32 %v81, 4294901760
    %v1383 = vsub.f32 %v81, %v1382
    %1384 = vmatpush1.msra.mxu0 %v1383
    %1385 = vmatprep.subr.mxu0 0.0
    %v1386 = vand.u32 %v82, 4294901760
    %v1387 = vsub.f32 %v82, %v1386
    %1388 = vmatpush1.msra.mxu0 %v1387
    %1389 = vmatprep.subr.mxu0 0.0
    %v1390 = vand.u32 %v83, 4294901760
    %v1391 = vsub.f32 %v83, %v1390
    %1392 = vmatpush1.msra.mxu0 %v1391
    %1393 = vmatprep.subr.mxu0 0.0
    %v1394 = vand.u32 %v84, 4294901760
    %v1395 = vsub.f32 %v84, %v1394
    %1396 = vmatpush1.msra.mxu0 %v1395
    %1397 = vmatprep.subr.mxu0 0.0
    %v1398 = vand.u32 %v85, 4294901760
    %v1399 = vsub.f32 %v85, %v1398
    %1400 = vmatpush1.msra.mxu0 %v1399
    %1401 = vmatprep.subr.mxu0 0.0
    %v1402 = vand.u32 %v86, 4294901760
    %v1403 = vsub.f32 %v86, %v1402
    %1404 = vmatpush1.msra.mxu0 %v1403
    %1405 = vmatprep.subr.mxu0 0.0
    %v1406 = vand.u32 %v87, 4294901760
    %v1407 = vsub.f32 %v87, %v1406
    %1408 = vmatpush1.msra.mxu0 %v1407
    %1409 = vmatprep.subr.mxu0 0.0
    %v1410 = vand.u32 %v88, 4294901760
    %v1411 = vsub.f32 %v88, %v1410
    %1412 = vmatpush1.msra.mxu0 %v1411
    %1413 = vmatprep.subr.mxu0 0.0
    %v1414 = vand.u32 %v89, 4294901760
    %v1415 = vsub.f32 %v89, %v1414
    %1416 = vmatpush1.msra.mxu0 %v1415
    %1417 = vmatprep.subr.mxu0 0.0
    %v1418 = vand.u32 %v90, 4294901760
    %v1419 = vsub.f32 %v90, %v1418
    %1420 = vmatpush1.msra.mxu0 %v1419
    %1421 = vmatprep.subr.mxu0 0.0
    %v1422 = vand.u32 %v91, 4294901760
    %v1423 = vsub.f32 %v91, %v1422
    %1424 = vmatpush1.msra.mxu0 %v1423
    %1425 = vmatprep.subr.mxu0 0.0
    %v1426 = vand.u32 %v92, 4294901760
    %v1427 = vsub.f32 %v92, %v1426
    %1428 = vmatpush1.msra.mxu0 %v1427
    %1429 = vmatprep.subr.mxu0 0.0
    %v1430 = vand.u32 %v93, 4294901760
    %v1431 = vsub.f32 %v93, %v1430
    %1432 = vmatpush1.msra.mxu0 %v1431
    %1433 = vmatprep.subr.mxu0 0.0
    %v1434 = vand.u32 %v94, 4294901760
    %v1435 = vsub.f32 %v94, %v1434
    %1436 = vmatpush1.msra.mxu0 %v1435
    %1437 = vmatprep.subr.mxu0 0.0
    %v1438 = vand.u32 %v95, 4294901760
    %v1439 = vsub.f32 %v95, %v1438
    %1440 = vmatpush1.msra.mxu0 %v1439
    %1441 = vmatprep.subr.mxu0 0.0
    %v1442 = vand.u32 %v96, 4294901760
    %v1443 = vsub.f32 %v96, %v1442
    %1444 = vmatpush1.msra.mxu0 %v1443
    %1445 = vmatprep.subr.mxu0 0.0
    %v1446 = vand.u32 %v97, 4294901760
    %v1447 = vsub.f32 %v97, %v1446
    %1448 = vmatpush1.msra.mxu0 %v1447
    %1449 = vmatprep.subr.mxu0 0.0
    %v1450 = vand.u32 %v98, 4294901760
    %v1451 = vsub.f32 %v98, %v1450
    %1452 = vmatpush1.msra.mxu0 %v1451
    %1453 = vmatprep.subr.mxu0 0.0
    %v1454 = vand.u32 %v99, 4294901760
    %v1455 = vsub.f32 %v99, %v1454
    %1456 = vmatpush1.msra.mxu0 %v1455
    %1457 = vmatprep.subr.mxu0 0.0
    %v1458 = vand.u32 %v100, 4294901760
    %v1459 = vsub.f32 %v100, %v1458
    %1460 = vmatpush1.msra.mxu0 %v1459
    %1461 = vmatprep.subr.mxu0 0.0
    %v1462 = vand.u32 %v101, 4294901760
    %v1463 = vsub.f32 %v101, %v1462
    %1464 = vmatpush1.msra.mxu0 %v1463
    %1465 = vmatprep.subr.mxu0 0.0
    %v1466 = vand.u32 %v102, 4294901760
    %v1467 = vsub.f32 %v102, %v1466
    %1468 = vmatpush1.msra.mxu0 %v1467
    %1469 = vmatprep.subr.mxu0 0.0
    %v1470 = vand.u32 %v103, 4294901760
    %v1471 = vsub.f32 %v103, %v1470
    %1472 = vmatpush1.msra.mxu0 %v1471
    %1473 = vmatprep.subr.mxu0 0.0
    %v1474 = vand.u32 %v104, 4294901760
    %v1475 = vsub.f32 %v104, %v1474
    %1476 = vmatpush1.msra.mxu0 %v1475
    %1477 = vmatprep.subr.mxu0 0.0
    %v1478 = vand.u32 %v105, 4294901760
    %v1479 = vsub.f32 %v105, %v1478
    %1480 = vmatpush1.msra.mxu0 %v1479
    %1481 = vmatprep.subr.mxu0 0.0
    %v1482 = vand.u32 %v106, 4294901760
    %v1483 = vsub.f32 %v106, %v1482
    %1484 = vmatpush1.msra.mxu0 %v1483
    %v1485 = vand.u32 %v141, 4294901760
    %v1486 = vsub.f32 %v141, %v1485
    %1487 = vmatprep.mubr.f32.mxu0 %v1486
    %v1488 = vand.u32 %v137, 4294901760
    %v1489 = vsub.f32 %v137, %v1488
    %1490 = vmatmul.mubr.f32.gmra.mrb[0].mxu0 %v1489
    %v1491 = vpop.f32.mrb[0].mxu0
    %v1492 = vadd.f32 %v1354, %v1491
    %v1493 = vpop.f32.mrb[0].mxu0
    %1494 = vdwg.mxu0
    %1495 = vmatprep.subr.mxu0 0.0
    %v1496 = vand.u32 %v75, 4294901760
    %1497 = vmatpush1.msra.mxu0 %v1496
    %1498 = vmatprep.subr.mxu0 0.0
    %v1499 = vand.u32 %v76, 4294901760
    %1500 = vmatpush1.msra.mxu0 %v1499
    %1501 = vmatprep.subr.mxu0 0.0
    %v1502 = vand.u32 %v77, 4294901760
    %1503 = vmatpush1.msra.mxu0 %v1502
    %1504 = vmatprep.subr.mxu0 0.0
    %v1505 = vand.u32 %v78, 4294901760
    %1506 = vmatpush1.msra.mxu0 %v1505
    %1507 = vmatprep.subr.mxu0 0.0
    %v1508 = vand.u32 %v79, 4294901760
    %1509 = vmatpush1.msra.mxu0 %v1508
    %1510 = vmatprep.subr.mxu0 0.0
    %v1511 = vand.u32 %v80, 4294901760
    %1512 = vmatpush1.msra.mxu0 %v1511
    %1513 = vmatprep.subr.mxu0 0.0
    %v1514 = vand.u32 %v81, 4294901760
    %1515 = vmatpush1.msra.mxu0 %v1514
    %1516 = vmatprep.subr.mxu0 0.0
    %v1517 = vand.u32 %v82, 4294901760
    %1518 = vmatpush1.msra.mxu0 %v1517
    %1519 = vmatprep.subr.mxu0 0.0
    %v1520 = vand.u32 %v83, 4294901760
    %1521 = vmatpush1.msra.mxu0 %v1520
    %1522 = vmatprep.subr.mxu0 0.0
    %v1523 = vand.u32 %v84, 4294901760
    %1524 = vmatpush1.msra.mxu0 %v1523
    %1525 = vmatprep.subr.mxu0 0.0
    %v1526 = vand.u32 %v85, 4294901760
    %1527 = vmatpush1.msra.mxu0 %v1526
    %1528 = vmatprep.subr.mxu0 0.0
    %v1529 = vand.u32 %v86, 4294901760
    %1530 = vmatpush1.msra.mxu0 %v1529
    %1531 = vmatprep.subr.mxu0 0.0
    %v1532 = vand.u32 %v87, 4294901760
    %1533 = vmatpush1.msra.mxu0 %v1532
    %1534 = vmatprep.subr.mxu0 0.0
    %v1535 = vand.u32 %v88, 4294901760
    %1536 = vmatpush1.msra.mxu0 %v1535
    %1537 = vmatprep.subr.mxu0 0.0
    %v1538 = vand.u32 %v89, 4294901760
    %1539 = vmatpush1.msra.mxu0 %v1538
    %1540 = vmatprep.subr.mxu0 0.0
    %v1541 = vand.u32 %v90, 4294901760
    %1542 = vmatpush1.msra.mxu0 %v1541
    %1543 = vmatprep.subr.mxu0 0.0
    %v1544 = vand.u32 %v91, 4294901760
    %1545 = vmatpush1.msra.mxu0 %v1544
    %1546 = vmatprep.subr.mxu0 0.0
    %v1547 = vand.u32 %v92, 4294901760
    %1548 = vmatpush1.msra.mxu0 %v1547
    %1549 = vmatprep.subr.mxu0 0.0
    %v1550 = vand.u32 %v93, 4294901760
    %1551 = vmatpush1.msra.mxu0 %v1550
    %1552 = vmatprep.subr.mxu0 0.0
    %v1553 = vand.u32 %v94, 4294901760
    %1554 = vmatpush1.msra.mxu0 %v1553
    %1555 = vmatprep.subr.mxu0 0.0
    %v1556 = vand.u32 %v95, 4294901760
    %1557 = vmatpush1.msra.mxu0 %v1556
    %1558 = vmatprep.subr.mxu0 0.0
    %v1559 = vand.u32 %v96, 4294901760
    %1560 = vmatpush1.msra.mxu0 %v1559
    %1561 = vmatprep.subr.mxu0 0.0
    %v1562 = vand.u32 %v97, 4294901760
    %1563 = vmatpush1.msra.mxu0 %v1562
    %1564 = vmatprep.subr.mxu0 0.0
    %v1565 = vand.u32 %v98, 4294901760
    %1566 = vmatpush1.msra.mxu0 %v1565
    %1567 = vmatprep.subr.mxu0 0.0
    %v1568 = vand.u32 %v99, 4294901760
    %1569 = vmatpush1.msra.mxu0 %v1568
    %1570 = vmatprep.subr.mxu0 0.0
    %v1571 = vand.u32 %v100, 4294901760
    %1572 = vmatpush1.msra.mxu0 %v1571
    %1573 = vmatprep.subr.mxu0 0.0
    %v1574 = vand.u32 %v101, 4294901760
    %1575 = vmatpush1.msra.mxu0 %v1574
    %1576 = vmatprep.subr.mxu0 0.0
    %v1577 = vand.u32 %v102, 4294901760
    %1578 = vmatpush1.msra.mxu0 %v1577
    %1579 = vmatprep.subr.mxu0 0.0
    %v1580 = vand.u32 %v103, 4294901760
    %1581 = vmatpush1.msra.mxu0 %v1580
    %1582 = vmatprep.subr.mxu0 0.0
    %v1583 = vand.u32 %v104, 4294901760
    %1584 = vmatpush1.msra.mxu0 %v1583
    %1585 = vmatprep.subr.mxu0 0.0
    %v1586 = vand.u32 %v105, 4294901760
    %1587 = vmatpush1.msra.mxu0 %v1586
    %1588 = vmatprep.subr.mxu0 0.0
    %v1589 = vand.u32 %v106, 4294901760
    %1590 = vmatpush1.msra.mxu0 %v1589
    %v1591 = vand.u32 %v141, 4294901760
    %v1592 = vsub.f32 %v141, %v1591
    %v1593 = vand.u32 %v1592, 4294901760
    %1594 = vmatprep.mubr.f32.mxu0 %v1593
    %v1595 = vand.u32 %v137, 4294901760
    %v1596 = vsub.f32 %v137, %v1595
    %v1597 = vand.u32 %v1596, 4294901760
    %1598 = vmatmul.mubr.f32.gmra.mrb[0].mxu0 %v1597
    %v1599 = vpop.f32.mrb[0].mxu0
    %v1600 = vadd.f32 %v1492, %v1599
    %v1601 = vpop.f32.mrb[0].mxu0
    %1602 = vdwg.mxu0
    %1603 = vmatprep.subr.mxu0 0.0
    %v1604 = vand.u32 %v75, 4294901760
    %v1605 = vsub.f32 %v75, %v1604
    %v1606 = vand.u32 %v1605, 4294901760
    %1607 = vmatpush1.msra.mxu0 %v1606
    %1608 = vmatprep.subr.mxu0 0.0
    %v1609 = vand.u32 %v76, 4294901760
    %v1610 = vsub.f32 %v76, %v1609
    %v1611 = vand.u32 %v1610, 4294901760
    %1612 = vmatpush1.msra.mxu0 %v1611
    %1613 = vmatprep.subr.mxu0 0.0
    %v1614 = vand.u32 %v77, 4294901760
    %v1615 = vsub.f32 %v77, %v1614
    %v1616 = vand.u32 %v1615, 4294901760
    %1617 = vmatpush1.msra.mxu0 %v1616
    %1618 = vmatprep.subr.mxu0 0.0
    %v1619 = vand.u32 %v78, 4294901760
    %v1620 = vsub.f32 %v78, %v1619
    %v1621 = vand.u32 %v1620, 4294901760
    %1622 = vmatpush1.msra.mxu0 %v1621
    %1623 = vmatprep.subr.mxu0 0.0
    %v1624 = vand.u32 %v79, 4294901760
    %v1625 = vsub.f32 %v79, %v1624
    %v1626 = vand.u32 %v1625, 4294901760
    %1627 = vmatpush1.msra.mxu0 %v1626
    %1628 = vmatprep.subr.mxu0 0.0
    %v1629 = vand.u32 %v80, 4294901760
    %v1630 = vsub.f32 %v80, %v1629
    %v1631 = vand.u32 %v1630, 4294901760
    %1632 = vmatpush1.msra.mxu0 %v1631
    %1633 = vmatprep.subr.mxu0 0.0
    %v1634 = vand.u32 %v81, 4294901760
    %v1635 = vsub.f32 %v81, %v1634
    %v1636 = vand.u32 %v1635, 4294901760
    %1637 = vmatpush1.msra.mxu0 %v1636
    %1638 = vmatprep.subr.mxu0 0.0
    %v1639 = vand.u32 %v82, 4294901760
    %v1640 = vsub.f32 %v82, %v1639
    %v1641 = vand.u32 %v1640, 4294901760
    %1642 = vmatpush1.msra.mxu0 %v1641
    %1643 = vmatprep.subr.mxu0 0.0
    %v1644 = vand.u32 %v83, 4294901760
    %v1645 = vsub.f32 %v83, %v1644
    %v1646 = vand.u32 %v1645, 4294901760
    %1647 = vmatpush1.msra.mxu0 %v1646
    %1648 = vmatprep.subr.mxu0 0.0
    %v1649 = vand.u32 %v84, 4294901760
    %v1650 = vsub.f32 %v84, %v1649
    %v1651 = vand.u32 %v1650, 4294901760
    %1652 = vmatpush1.msra.mxu0 %v1651
    %1653 = vmatprep.subr.mxu0 0.0
    %v1654 = vand.u32 %v85, 4294901760
    %v1655 = vsub.f32 %v85, %v1654
    %v1656 = vand.u32 %v1655, 4294901760
    %1657 = vmatpush1.msra.mxu0 %v1656
    %1658 = vmatprep.subr.mxu0 0.0
    %v1659 = vand.u32 %v86, 4294901760
    %v1660 = vsub.f32 %v86, %v1659
    %v1661 = vand.u32 %v1660, 4294901760
    %1662 = vmatpush1.msra.mxu0 %v1661
    %1663 = vmatprep.subr.mxu0 0.0
    %v1664 = vand.u32 %v87, 4294901760
    %v1665 = vsub.f32 %v87, %v1664
    %v1666 = vand.u32 %v1665, 4294901760
    %1667 = vmatpush1.msra.mxu0 %v1666
    %1668 = vmatprep.subr.mxu0 0.0
    %v1669 = vand.u32 %v88, 4294901760
    %v1670 = vsub.f32 %v88, %v1669
    %v1671 = vand.u32 %v1670, 4294901760
    %1672 = vmatpush1.msra.mxu0 %v1671
    %1673 = vmatprep.subr.mxu0 0.0
    %v1674 = vand.u32 %v89, 4294901760
    %v1675 = vsub.f32 %v89, %v1674
    %v1676 = vand.u32 %v1675, 4294901760
    %1677 = vmatpush1.msra.mxu0 %v1676
    %1678 = vmatprep.subr.mxu0 0.0
    %v1679 = vand.u32 %v90, 4294901760
    %v1680 = vsub.f32 %v90, %v1679
    %v1681 = vand.u32 %v1680, 4294901760
    %1682 = vmatpush1.msra.mxu0 %v1681
    %1683 = vmatprep.subr.mxu0 0.0
    %v1684 = vand.u32 %v91, 4294901760
    %v1685 = vsub.f32 %v91, %v1684
    %v1686 = vand.u32 %v1685, 4294901760
    %1687 = vmatpush1.msra.mxu0 %v1686
    %1688 = vmatprep.subr.mxu0 0.0
    %v1689 = vand.u32 %v92, 4294901760
    %v1690 = vsub.f32 %v92, %v1689
    %v1691 = vand.u32 %v1690, 4294901760
    %1692 = vmatpush1.msra.mxu0 %v1691
    %1693 = vmatprep.subr.mxu0 0.0
    %v1694 = vand.u32 %v93, 4294901760
    %v1695 = vsub.f32 %v93, %v1694
    %v1696 = vand.u32 %v1695, 4294901760
    %1697 = vmatpush1.msra.mxu0 %v1696
    %1698 = vmatprep.subr.mxu0 0.0
    %v1699 = vand.u32 %v94, 4294901760
    %v1700 = vsub.f32 %v94, %v1699
    %v1701 = vand.u32 %v1700, 4294901760
    %1702 = vmatpush1.msra.mxu0 %v1701
    %1703 = vmatprep.subr.mxu0 0.0
    %v1704 = vand.u32 %v95, 4294901760
    %v1705 = vsub.f32 %v95, %v1704
    %v1706 = vand.u32 %v1705, 4294901760
    %1707 = vmatpush1.msra.mxu0 %v1706
    %1708 = vmatprep.subr.mxu0 0.0
    %v1709 = vand.u32 %v96, 4294901760
    %v1710 = vsub.f32 %v96, %v1709
    %v1711 = vand.u32 %v1710, 4294901760
    %1712 = vmatpush1.msra.mxu0 %v1711
    %1713 = vmatprep.subr.mxu0 0.0
    %v1714 = vand.u32 %v97, 4294901760
    %v1715 = vsub.f32 %v97, %v1714
    %v1716 = vand.u32 %v1715, 4294901760
    %1717 = vmatpush1.msra.mxu0 %v1716
    %1718 = vmatprep.subr.mxu0 0.0
    %v1719 = vand.u32 %v98, 4294901760
    %v1720 = vsub.f32 %v98, %v1719
    %v1721 = vand.u32 %v1720, 4294901760
    %1722 = vmatpush1.msra.mxu0 %v1721
    %1723 = vmatprep.subr.mxu0 0.0
    %v1724 = vand.u32 %v99, 4294901760
    %v1725 = vsub.f32 %v99, %v1724
    %v1726 = vand.u32 %v1725, 4294901760
    %1727 = vmatpush1.msra.mxu0 %v1726
    %1728 = vmatprep.subr.mxu0 0.0
    %v1729 = vand.u32 %v100, 4294901760
    %v1730 = vsub.f32 %v100, %v1729
    %v1731 = vand.u32 %v1730, 4294901760
    %1732 = vmatpush1.msra.mxu0 %v1731
    %1733 = vmatprep.subr.mxu0 0.0
    %v1734 = vand.u32 %v101, 4294901760
    %v1735 = vsub.f32 %v101, %v1734
    %v1736 = vand.u32 %v1735, 4294901760
    %1737 = vmatpush1.msra.mxu0 %v1736
    %1738 = vmatprep.subr.mxu0 0.0
    %v1739 = vand.u32 %v102, 4294901760
    %v1740 = vsub.f32 %v102, %v1739
    %v1741 = vand.u32 %v1740, 4294901760
    %1742 = vmatpush1.msra.mxu0 %v1741
    %1743 = vmatprep.subr.mxu0 0.0
    %v1744 = vand.u32 %v103, 4294901760
    %v1745 = vsub.f32 %v103, %v1744
    %v1746 = vand.u32 %v1745, 4294901760
    %1747 = vmatpush1.msra.mxu0 %v1746
    %1748 = vmatprep.subr.mxu0 0.0
    %v1749 = vand.u32 %v104, 4294901760
    %v1750 = vsub.f32 %v104, %v1749
    %v1751 = vand.u32 %v1750, 4294901760
    %1752 = vmatpush1.msra.mxu0 %v1751
    %1753 = vmatprep.subr.mxu0 0.0
    %v1754 = vand.u32 %v105, 4294901760
    %v1755 = vsub.f32 %v105, %v1754
    %v1756 = vand.u32 %v1755, 4294901760
    %1757 = vmatpush1.msra.mxu0 %v1756
    %1758 = vmatprep.subr.mxu0 0.0
    %v1759 = vand.u32 %v106, 4294901760
    %v1760 = vsub.f32 %v106, %v1759
    %v1761 = vand.u32 %v1760, 4294901760
    %1762 = vmatpush1.msra.mxu0 %v1761
    %v1763 = vand.u32 %v141, 4294901760
    %1764 = vmatprep.mubr.f32.mxu0 %v1763
    %v1765 = vand.u32 %v137, 4294901760
    %1766 = vmatmul.mubr.f32.gmra.mrb[0].mxu0 %v1765
    %v1767 = vpop.f32.mrb[0].mxu0
    %v1768 = vadd.f32 %v1600, %v1767
    %v1769 = vpop.f32.mrb[0].mxu0
    %1770 = vdwg.mxu0
    %1771 = vmatprep.subr.mxu0 0.0
    %v1772 = vand.u32 %v75, 4294901760
    %1773 = vmatpush1.msra.mxu0 %v1772
    %1774 = vmatprep.subr.mxu0 0.0
    %v1775 = vand.u32 %v76, 4294901760
    %1776 = vmatpush1.msra.mxu0 %v1775
    %1777 = vmatprep.subr.mxu0 0.0
    %v1778 = vand.u32 %v77, 4294901760
    %1779 = vmatpush1.msra.mxu0 %v1778
    %1780 = vmatprep.subr.mxu0 0.0
    %v1781 = vand.u32 %v78, 4294901760
    %1782 = vmatpush1.msra.mxu0 %v1781
    %1783 = vmatprep.subr.mxu0 0.0
    %v1784 = vand.u32 %v79, 4294901760
    %1785 = vmatpush1.msra.mxu0 %v1784
    %1786 = vmatprep.subr.mxu0 0.0
    %v1787 = vand.u32 %v80, 4294901760
    %1788 = vmatpush1.msra.mxu0 %v1787
    %1789 = vmatprep.subr.mxu0 0.0
    %v1790 = vand.u32 %v81, 4294901760
    %1791 = vmatpush1.msra.mxu0 %v1790
    %1792 = vmatprep.subr.mxu0 0.0
    %v1793 = vand.u32 %v82, 4294901760
    %1794 = vmatpush1.msra.mxu0 %v1793
    %1795 = vmatprep.subr.mxu0 0.0
    %v1796 = vand.u32 %v83, 4294901760
    %1797 = vmatpush1.msra.mxu0 %v1796
    %1798 = vmatprep.subr.mxu0 0.0
    %v1799 = vand.u32 %v84, 4294901760
    %1800 = vmatpush1.msra.mxu0 %v1799
    %1801 = vmatprep.subr.mxu0 0.0
    %v1802 = vand.u32 %v85, 4294901760
    %1803 = vmatpush1.msra.mxu0 %v1802
    %1804 = vmatprep.subr.mxu0 0.0
    %v1805 = vand.u32 %v86, 4294901760
    %1806 = vmatpush1.msra.mxu0 %v1805
    %1807 = vmatprep.subr.mxu0 0.0
    %v1808 = vand.u32 %v87, 4294901760
    %1809 = vmatpush1.msra.mxu0 %v1808
    %1810 = vmatprep.subr.mxu0 0.0
    %v1811 = vand.u32 %v88, 4294901760
    %1812 = vmatpush1.msra.mxu0 %v1811
    %1813 = vmatprep.subr.mxu0 0.0
    %v1814 = vand.u32 %v89, 4294901760
    %1815 = vmatpush1.msra.mxu0 %v1814
    %1816 = vmatprep.subr.mxu0 0.0
    %v1817 = vand.u32 %v90, 4294901760
    %1818 = vmatpush1.msra.mxu0 %v1817
    %1819 = vmatprep.subr.mxu0 0.0
    %v1820 = vand.u32 %v91, 4294901760
    %1821 = vmatpush1.msra.mxu0 %v1820
    %1822 = vmatprep.subr.mxu0 0.0
    %v1823 = vand.u32 %v92, 4294901760
    %1824 = vmatpush1.msra.mxu0 %v1823
    %1825 = vmatprep.subr.mxu0 0.0
    %v1826 = vand.u32 %v93, 4294901760
    %1827 = vmatpush1.msra.mxu0 %v1826
    %1828 = vmatprep.subr.mxu0 0.0
    %v1829 = vand.u32 %v94, 4294901760
    %1830 = vmatpush1.msra.mxu0 %v1829
    %1831 = vmatprep.subr.mxu0 0.0
    %v1832 = vand.u32 %v95, 4294901760
    %1833 = vmatpush1.msra.mxu0 %v1832
    %1834 = vmatprep.subr.mxu0 0.0
    %v1835 = vand.u32 %v96, 4294901760
    %1836 = vmatpush1.msra.mxu0 %v1835
    %1837 = vmatprep.subr.mxu0 0.0
    %v1838 = vand.u32 %v97, 4294901760
    %1839 = vmatpush1.msra.mxu0 %v1838
    %1840 = vmatprep.subr.mxu0 0.0
    %v1841 = vand.u32 %v98, 4294901760
    %1842 = vmatpush1.msra.mxu0 %v1841
    %1843 = vmatprep.subr.mxu0 0.0
    %v1844 = vand.u32 %v99, 4294901760
    %1845 = vmatpush1.msra.mxu0 %v1844
    %1846 = vmatprep.subr.mxu0 0.0
    %v1847 = vand.u32 %v100, 4294901760
    %1848 = vmatpush1.msra.mxu0 %v1847
    %1849 = vmatprep.subr.mxu0 0.0
    %v1850 = vand.u32 %v101, 4294901760
    %1851 = vmatpush1.msra.mxu0 %v1850
    %1852 = vmatprep.subr.mxu0 0.0
    %v1853 = vand.u32 %v102, 4294901760
    %1854 = vmatpush1.msra.mxu0 %v1853
    %1855 = vmatprep.subr.mxu0 0.0
    %v1856 = vand.u32 %v103, 4294901760
    %1857 = vmatpush1.msra.mxu0 %v1856
    %1858 = vmatprep.subr.mxu0 0.0
    %v1859 = vand.u32 %v104, 4294901760
    %1860 = vmatpush1.msra.mxu0 %v1859
    %1861 = vmatprep.subr.mxu0 0.0
    %v1862 = vand.u32 %v105, 4294901760
    %1863 = vmatpush1.msra.mxu0 %v1862
    %1864 = vmatprep.subr.mxu0 0.0
    %v1865 = vand.u32 %v106, 4294901760
    %1866 = vmatpush1.msra.mxu0 %v1865
    %v1867 = vand.u32 %v141, 4294901760
    %1868 = vmatprep.mubr.f32.mxu0 %v1867
    %v1869 = vand.u32 %v137, 4294901760
    %1870 = vmatmul.mubr.f32.gmra.mrb[0].mxu0 %v1869
    %v1871 = vpop.f32.mrb[0].mxu0
    %v1872 = vadd.f32 %v1768, %v1871
    %v1873 = vpop.f32.mrb[0].mxu0
    %1874 = vdwg.mxu0
    %1875 = vmatprep.subr.mxu0 0.0
    %v1876 = vand.u32 %v107, 4294901760
    %1877 = vmatpush1.msra.mxu0 %v1876
    %1878 = vmatprep.subr.mxu0 0.0
    %v1879 = vand.u32 %v108, 4294901760
    %1880 = vmatpush1.msra.mxu0 %v1879
    %1881 = vmatprep.subr.mxu0 0.0
    %v1882 = vand.u32 %v109, 4294901760
    %1883 = vmatpush1.msra.mxu0 %v1882
    %1884 = vmatprep.subr.mxu0 0.0
    %v1885 = vand.u32 %v110, 4294901760
    %1886 = vmatpush1.msra.mxu0 %v1885
    %1887 = vmatprep.subr.mxu0 0.0
    %v1888 = vand.u32 %v111, 4294901760
    %1889 = vmatpush1.msra.mxu0 %v1888
    %1890 = vmatprep.subr.mxu0 0.0
    %v1891 = vand.u32 %v112, 4294901760
    %1892 = vmatpush1.msra.mxu0 %v1891
    %1893 = vmatprep.subr.mxu0 0.0
    %v1894 = vand.u32 %v113, 4294901760
    %1895 = vmatpush1.msra.mxu0 %v1894
    %1896 = vmatprep.subr.mxu0 0.0
    %v1897 = vand.u32 %v114, 4294901760
    %1898 = vmatpush1.msra.mxu0 %v1897
    %1899 = vmatprep.subr.mxu0 0.0
    %v1900 = vand.u32 %v115, 4294901760
    %1901 = vmatpush1.msra.mxu0 %v1900
    %1902 = vmatprep.subr.mxu0 0.0
    %v1903 = vand.u32 %v116, 4294901760
    %1904 = vmatpush1.msra.mxu0 %v1903
    %1905 = vmatprep.subr.mxu0 0.0
    %v1906 = vand.u32 %v117, 4294901760
    %1907 = vmatpush1.msra.mxu0 %v1906
    %1908 = vmatprep.subr.mxu0 0.0
    %v1909 = vand.u32 %v118, 4294901760
    %1910 = vmatpush1.msra.mxu0 %v1909
    %1911 = vmatprep.subr.mxu0 0.0
    %v1912 = vand.u32 %v119, 4294901760
    %1913 = vmatpush1.msra.mxu0 %v1912
    %1914 = vmatprep.subr.mxu0 0.0
    %v1915 = vand.u32 %v120, 4294901760
    %1916 = vmatpush1.msra.mxu0 %v1915
    %1917 = vmatprep.subr.mxu0 0.0
    %v1918 = vand.u32 %v121, 4294901760
    %1919 = vmatpush1.msra.mxu0 %v1918
    %1920 = vmatprep.subr.mxu0 0.0
    %v1921 = vand.u32 %v122, 4294901760
    %1922 = vmatpush1.msra.mxu0 %v1921
    %1923 = vmatprep.subr.mxu0 0.0
    %1924 = vmatpush1.msra.mxu0 0.0
    %1925 = vmatprep.subr.mxu0 0.0
    %1926 = vmatpush1.msra.mxu0 0.0
    %1927 = vmatprep.subr.mxu0 0.0
    %1928 = vmatpush1.msra.mxu0 0.0
    %1929 = vmatprep.subr.mxu0 0.0
    %1930 = vmatpush1.msra.mxu0 0.0
    %1931 = vmatprep.subr.mxu0 0.0
    %1932 = vmatpush1.msra.mxu0 0.0
    %1933 = vmatprep.subr.mxu0 0.0
    %1934 = vmatpush1.msra.mxu0 0.0
    %1935 = vmatprep.subr.mxu0 0.0
    %1936 = vmatpush1.msra.mxu0 0.0
    %1937 = vmatprep.subr.mxu0 0.0
    %1938 = vmatpush1.msra.mxu0 0.0
    %1939 = vmatprep.subr.mxu0 0.0
    %1940 = vmatpush1.msra.mxu0 0.0
    %1941 = vmatprep.subr.mxu0 0.0
    %1942 = vmatpush1.msra.mxu0 0.0
    %1943 = vmatprep.subr.mxu0 0.0
    %1944 = vmatpush1.msra.mxu0 0.0
    %1945 = vmatprep.subr.mxu0 0.0
    %1946 = vmatpush1.msra.mxu0 0.0
    %1947 = vmatprep.subr.mxu0 0.0
    %1948 = vmatpush1.msra.mxu0 0.0
    %1949 = vmatprep.subr.mxu0 0.0
    %1950 = vmatpush1.msra.mxu0 0.0
    %1951 = vmatprep.subr.mxu0 0.0
    %1952 = vmatpush1.msra.mxu0 0.0
    %1953 = vmatprep.subr.mxu0 0.0
    %1954 = vmatpush1.msra.mxu0 0.0
    %1955 = vmatprep.mubr.f32.mxu0 0.0
    %v1956 = vand.u32 %v145, 4294901760
    %v1957 = vsub.f32 %v145, %v1956
    %v1958 = vand.u32 %v1957, 4294901760
    %v1959 = vsub.f32 %v1957, %v1958
    %v1960 = vand.u32 %v1959, 4294901760
    %1961 = vmatmul.mubr.f32.gmra.mrb[0].mxu0 %v1960
    %v1962 = vpop.f32.mrb[0].mxu0
    %v1963 = vadd.f32 %v1872, %v1962
    %v1964 = vpop.f32.mrb[0].mxu0
    %1965 = vdwg.mxu0
    %1966 = vmatprep.subr.mxu0 0.0
    %v1967 = vand.u32 %v107, 4294901760
    %v1968 = vsub.f32 %v107, %v1967
    %v1969 = vand.u32 %v1968, 4294901760
    %v1970 = vsub.f32 %v1968, %v1969
    %v1971 = vand.u32 %v1970, 4294901760
    %1972 = vmatpush1.msra.mxu0 %v1971
    %1973 = vmatprep.subr.mxu0 0.0
    %v1974 = vand.u32 %v108, 4294901760
    %v1975 = vsub.f32 %v108, %v1974
    %v1976 = vand.u32 %v1975, 4294901760
    %v1977 = vsub.f32 %v1975, %v1976
    %v1978 = vand.u32 %v1977, 4294901760
    %1979 = vmatpush1.msra.mxu0 %v1978
    %1980 = vmatprep.subr.mxu0 0.0
    %v1981 = vand.u32 %v109, 4294901760
    %v1982 = vsub.f32 %v109, %v1981
    %v1983 = vand.u32 %v1982, 4294901760
    %v1984 = vsub.f32 %v1982, %v1983
    %v1985 = vand.u32 %v1984, 4294901760
    %1986 = vmatpush1.msra.mxu0 %v1985
    %1987 = vmatprep.subr.mxu0 0.0
    %v1988 = vand.u32 %v110, 4294901760
    %v1989 = vsub.f32 %v110, %v1988
    %v1990 = vand.u32 %v1989, 4294901760
    %v1991 = vsub.f32 %v1989, %v1990
    %v1992 = vand.u32 %v1991, 4294901760
    %1993 = vmatpush1.msra.mxu0 %v1992
    %1994 = vmatprep.subr.mxu0 0.0
    %v1995 = vand.u32 %v111, 4294901760
    %v1996 = vsub.f32 %v111, %v1995
    %v1997 = vand.u32 %v1996, 4294901760
    %v1998 = vsub.f32 %v1996, %v1997
    %v1999 = vand.u32 %v1998, 4294901760
    %2000 = vmatpush1.msra.mxu0 %v1999
    %2001 = vmatprep.subr.mxu0 0.0
    %v2002 = vand.u32 %v112, 4294901760
    %v2003 = vsub.f32 %v112, %v2002
    %v2004 = vand.u32 %v2003, 4294901760
    %v2005 = vsub.f32 %v2003, %v2004
    %v2006 = vand.u32 %v2005, 4294901760
    %2007 = vmatpush1.msra.mxu0 %v2006
    %2008 = vmatprep.subr.mxu0 0.0
    %v2009 = vand.u32 %v113, 4294901760
    %v2010 = vsub.f32 %v113, %v2009
    %v2011 = vand.u32 %v2010, 4294901760
    %v2012 = vsub.f32 %v2010, %v2011
    %v2013 = vand.u32 %v2012, 4294901760
    %2014 = vmatpush1.msra.mxu0 %v2013
    %2015 = vmatprep.subr.mxu0 0.0
    %v2016 = vand.u32 %v114, 4294901760
    %v2017 = vsub.f32 %v114, %v2016
    %v2018 = vand.u32 %v2017, 4294901760
    %v2019 = vsub.f32 %v2017, %v2018
    %v2020 = vand.u32 %v2019, 4294901760
    %2021 = vmatpush1.msra.mxu0 %v2020
    %2022 = vmatprep.subr.mxu0 0.0
    %v2023 = vand.u32 %v115, 4294901760
    %v2024 = vsub.f32 %v115, %v2023
    %v2025 = vand.u32 %v2024, 4294901760
    %v2026 = vsub.f32 %v2024, %v2025
    %v2027 = vand.u32 %v2026, 4294901760
    %2028 = vmatpush1.msra.mxu0 %v2027
    %2029 = vmatprep.subr.mxu0 0.0
    %v2030 = vand.u32 %v116, 4294901760
    %v2031 = vsub.f32 %v116, %v2030
    %v2032 = vand.u32 %v2031, 4294901760
    %v2033 = vsub.f32 %v2031, %v2032
    %v2034 = vand.u32 %v2033, 4294901760
    %2035 = vmatpush1.msra.mxu0 %v2034
    %2036 = vmatprep.subr.mxu0 0.0
    %v2037 = vand.u32 %v117, 4294901760
    %v2038 = vsub.f32 %v117, %v2037
    %v2039 = vand.u32 %v2038, 4294901760
    %v2040 = vsub.f32 %v2038, %v2039
    %v2041 = vand.u32 %v2040, 4294901760
    %2042 = vmatpush1.msra.mxu0 %v2041
    %2043 = vmatprep.subr.mxu0 0.0
    %v2044 = vand.u32 %v118, 4294901760
    %v2045 = vsub.f32 %v118, %v2044
    %v2046 = vand.u32 %v2045, 4294901760
    %v2047 = vsub.f32 %v2045, %v2046
    %v2048 = vand.u32 %v2047, 4294901760
    %2049 = vmatpush1.msra.mxu0 %v2048
    %2050 = vmatprep.subr.mxu0 0.0
    %v2051 = vand.u32 %v119, 4294901760
    %v2052 = vsub.f32 %v119, %v2051
    %v2053 = vand.u32 %v2052, 4294901760
    %v2054 = vsub.f32 %v2052, %v2053
    %v2055 = vand.u32 %v2054, 4294901760
    %2056 = vmatpush1.msra.mxu0 %v2055
    %2057 = vmatprep.subr.mxu0 0.0
    %v2058 = vand.u32 %v120, 4294901760
    %v2059 = vsub.f32 %v120, %v2058
    %v2060 = vand.u32 %v2059, 4294901760
    %v2061 = vsub.f32 %v2059, %v2060
    %v2062 = vand.u32 %v2061, 4294901760
    %2063 = vmatpush1.msra.mxu0 %v2062
    %2064 = vmatprep.subr.mxu0 0.0
    %v2065 = vand.u32 %v121, 4294901760
    %v2066 = vsub.f32 %v121, %v2065
    %v2067 = vand.u32 %v2066, 4294901760
    %v2068 = vsub.f32 %v2066, %v2067
    %v2069 = vand.u32 %v2068, 4294901760
    %2070 = vmatpush1.msra.mxu0 %v2069
    %2071 = vmatprep.subr.mxu0 0.0
    %v2072 = vand.u32 %v122, 4294901760
    %v2073 = vsub.f32 %v122, %v2072
    %v2074 = vand.u32 %v2073, 4294901760
    %v2075 = vsub.f32 %v2073, %v2074
    %v2076 = vand.u32 %v2075, 4294901760
    %2077 = vmatpush1.msra.mxu0 %v2076
    %2078 = vmatprep.subr.mxu0 0.0
    %2079 = vmatpush1.msra.mxu0 0.0
    %2080 = vmatprep.subr.mxu0 0.0
    %2081 = vmatpush1.msra.mxu0 0.0
    %2082 = vmatprep.subr.mxu0 0.0
    %2083 = vmatpush1.msra.mxu0 0.0
    %2084 = vmatprep.subr.mxu0 0.0
    %2085 = vmatpush1.msra.mxu0 0.0
    %2086 = vmatprep.subr.mxu0 0.0
    %2087 = vmatpush1.msra.mxu0 0.0
    %2088 = vmatprep.subr.mxu0 0.0
    %2089 = vmatpush1.msra.mxu0 0.0
    %2090 = vmatprep.subr.mxu0 0.0
    %2091 = vmatpush1.msra.mxu0 0.0
    %2092 = vmatprep.subr.mxu0 0.0
    %2093 = vmatpush1.msra.mxu0 0.0
    %2094 = vmatprep.subr.mxu0 0.0
    %2095 = vmatpush1.msra.mxu0 0.0
    %2096 = vmatprep.subr.mxu0 0.0
    %2097 = vmatpush1.msra.mxu0 0.0
    %2098 = vmatprep.subr.mxu0 0.0
    %2099 = vmatpush1.msra.mxu0 0.0
    %2100 = vmatprep.subr.mxu0 0.0
    %2101 = vmatpush1.msra.mxu0 0.0
    %2102 = vmatprep.subr.mxu0 0.0
    %2103 = vmatpush1.msra.mxu0 0.0
    %2104 = vmatprep.subr.mxu0 0.0
    %2105 = vmatpush1.msra.mxu0 0.0
    %2106 = vmatprep.subr.mxu0 0.0
    %2107 = vmatpush1.msra.mxu0 0.0
    %2108 = vmatprep.subr.mxu0 0.0
    %2109 = vmatpush1.msra.mxu0 0.0
    %2110 = vmatprep.mubr.f32.mxu0 0.0
    %v2111 = vand.u32 %v145, 4294901760
    %2112 = vmatmul.mubr.f32.gmra.mrb[0].mxu0 %v2111
    %v2113 = vpop.f32.mrb[0].mxu0
    %v2114 = vadd.f32 %v1963, %v2113
    %v2115 = vpop.f32.mrb[0].mxu0
    %2116 = vdwg.mxu0
    %2117 = vmatprep.subr.mxu0 0.0
    %v2118 = vand.u32 %v107, 4294901760
    %v2119 = vsub.f32 %v107, %v2118
    %2120 = vmatpush1.msra.mxu0 %v2119
    %2121 = vmatprep.subr.mxu0 0.0
    %v2122 = vand.u32 %v108, 4294901760
    %v2123 = vsub.f32 %v108, %v2122
    %2124 = vmatpush1.msra.mxu0 %v2123
    %2125 = vmatprep.subr.mxu0 0.0
    %v2126 = vand.u32 %v109, 4294901760
    %v2127 = vsub.f32 %v109, %v2126
    %2128 = vmatpush1.msra.mxu0 %v2127
    %2129 = vmatprep.subr.mxu0 0.0
    %v2130 = vand.u32 %v110, 4294901760
    %v2131 = vsub.f32 %v110, %v2130
    %2132 = vmatpush1.msra.mxu0 %v2131
    %2133 = vmatprep.subr.mxu0 0.0
    %v2134 = vand.u32 %v111, 4294901760
    %v2135 = vsub.f32 %v111, %v2134
    %2136 = vmatpush1.msra.mxu0 %v2135
    %2137 = vmatprep.subr.mxu0 0.0
    %v2138 = vand.u32 %v112, 4294901760
    %v2139 = vsub.f32 %v112, %v2138
    %2140 = vmatpush1.msra.mxu0 %v2139
    %2141 = vmatprep.subr.mxu0 0.0
    %v2142 = vand.u32 %v113, 4294901760
    %v2143 = vsub.f32 %v113, %v2142
    %2144 = vmatpush1.msra.mxu0 %v2143
    %2145 = vmatprep.subr.mxu0 0.0
    %v2146 = vand.u32 %v114, 4294901760
    %v2147 = vsub.f32 %v114, %v2146
    %2148 = vmatpush1.msra.mxu0 %v2147
    %2149 = vmatprep.subr.mxu0 0.0
    %v2150 = vand.u32 %v115, 4294901760
    %v2151 = vsub.f32 %v115, %v2150
    %2152 = vmatpush1.msra.mxu0 %v2151
    %2153 = vmatprep.subr.mxu0 0.0
    %v2154 = vand.u32 %v116, 4294901760
    %v2155 = vsub.f32 %v116, %v2154
    %2156 = vmatpush1.msra.mxu0 %v2155
    %2157 = vmatprep.subr.mxu0 0.0
    %v2158 = vand.u32 %v117, 4294901760
    %v2159 = vsub.f32 %v117, %v2158
    %2160 = vmatpush1.msra.mxu0 %v2159
    %2161 = vmatprep.subr.mxu0 0.0
    %v2162 = vand.u32 %v118, 4294901760
    %v2163 = vsub.f32 %v118, %v2162
    %2164 = vmatpush1.msra.mxu0 %v2163
    %2165 = vmatprep.subr.mxu0 0.0
    %v2166 = vand.u32 %v119, 4294901760
    %v2167 = vsub.f32 %v119, %v2166
    %2168 = vmatpush1.msra.mxu0 %v2167
    %2169 = vmatprep.subr.mxu0 0.0
    %v2170 = vand.u32 %v120, 4294901760
    %v2171 = vsub.f32 %v120, %v2170
    %2172 = vmatpush1.msra.mxu0 %v2171
    %2173 = vmatprep.subr.mxu0 0.0
    %v2174 = vand.u32 %v121, 4294901760
    %v2175 = vsub.f32 %v121, %v2174
    %2176 = vmatpush1.msra.mxu0 %v2175
    %2177 = vmatprep.subr.mxu0 0.0
    %v2178 = vand.u32 %v122, 4294901760
    %v2179 = vsub.f32 %v122, %v2178
    %2180 = vmatpush1.msra.mxu0 %v2179
    %2181 = vmatprep.subr.mxu0 0.0
    %2182 = vmatpush1.msra.mxu0 0.0
    %2183 = vmatprep.subr.mxu0 0.0
    %2184 = vmatpush1.msra.mxu0 0.0
    %2185 = vmatprep.subr.mxu0 0.0
    %2186 = vmatpush1.msra.mxu0 0.0
    %2187 = vmatprep.subr.mxu0 0.0
    %2188 = vmatpush1.msra.mxu0 0.0
    %2189 = vmatprep.subr.mxu0 0.0
    %2190 = vmatpush1.msra.mxu0 0.0
    %2191 = vmatprep.subr.mxu0 0.0
    %2192 = vmatpush1.msra.mxu0 0.0
    %2193 = vmatprep.subr.mxu0 0.0
    %2194 = vmatpush1.msra.mxu0 0.0
    %2195 = vmatprep.subr.mxu0 0.0
    %2196 = vmatpush1.msra.mxu0 0.0
    %2197 = vmatprep.subr.mxu0 0.0
    %2198 = vmatpush1.msra.mxu0 0.0
    %2199 = vmatprep.subr.mxu0 0.0
    %2200 = vmatpush1.msra.mxu0 0.0
    %2201 = vmatprep.subr.mxu0 0.0
    %2202 = vmatpush1.msra.mxu0 0.0
    %2203 = vmatprep.subr.mxu0 0.0
    %2204 = vmatpush1.msra.mxu0 0.0
    %2205 = vmatprep.subr.mxu0 0.0
    %2206 = vmatpush1.msra.mxu0 0.0
    %2207 = vmatprep.subr.mxu0 0.0
    %2208 = vmatpush1.msra.mxu0 0.0
    %2209 = vmatprep.subr.mxu0 0.0
    %2210 = vmatpush1.msra.mxu0 0.0
    %2211 = vmatprep.subr.mxu0 0.0
    %2212 = vmatpush1.msra.mxu0 0.0
    %2213 = vmatprep.mubr.f32.mxu0 0.0
    %v2214 = vand.u32 %v145, 4294901760
    %v2215 = vsub.f32 %v145, %v2214
    %2216 = vmatmul.mubr.f32.gmra.mrb[0].mxu0 %v2215
    %v2217 = vpop.f32.mrb[0].mxu0
    %v2218 = vadd.f32 %v2114, %v2217
    %v2219 = vpop.f32.mrb[0].mxu0
    %2220 = vdwg.mxu0
    %2221 = vmatprep.subr.mxu0 0.0
    %v2222 = vand.u32 %v107, 4294901760
    %2223 = vmatpush1.msra.mxu0 %v2222
    %2224 = vmatprep.subr.mxu0 0.0
    %v2225 = vand.u32 %v108, 4294901760
    %2226 = vmatpush1.msra.mxu0 %v2225
    %2227 = vmatprep.subr.mxu0 0.0
    %v2228 = vand.u32 %v109, 4294901760
    %2229 = vmatpush1.msra.mxu0 %v2228
    %2230 = vmatprep.subr.mxu0 0.0
    %v2231 = vand.u32 %v110, 4294901760
    %2232 = vmatpush1.msra.mxu0 %v2231
    %2233 = vmatprep.subr.mxu0 0.0
    %v2234 = vand.u32 %v111, 4294901760
    %2235 = vmatpush1.msra.mxu0 %v2234
    %2236 = vmatprep.subr.mxu0 0.0
    %v2237 = vand.u32 %v112, 4294901760
    %2238 = vmatpush1.msra.mxu0 %v2237
    %2239 = vmatprep.subr.mxu0 0.0
    %v2240 = vand.u32 %v113, 4294901760
    %2241 = vmatpush1.msra.mxu0 %v2240
    %2242 = vmatprep.subr.mxu0 0.0
    %v2243 = vand.u32 %v114, 4294901760
    %2244 = vmatpush1.msra.mxu0 %v2243
    %2245 = vmatprep.subr.mxu0 0.0
    %v2246 = vand.u32 %v115, 4294901760
    %2247 = vmatpush1.msra.mxu0 %v2246
    %2248 = vmatprep.subr.mxu0 0.0
    %v2249 = vand.u32 %v116, 4294901760
    %2250 = vmatpush1.msra.mxu0 %v2249
    %2251 = vmatprep.subr.mxu0 0.0
    %v2252 = vand.u32 %v117, 4294901760
    %2253 = vmatpush1.msra.mxu0 %v2252
    %2254 = vmatprep.subr.mxu0 0.0
    %v2255 = vand.u32 %v118, 4294901760
    %2256 = vmatpush1.msra.mxu0 %v2255
    %2257 = vmatprep.subr.mxu0 0.0
    %v2258 = vand.u32 %v119, 4294901760
    %2259 = vmatpush1.msra.mxu0 %v2258
    %2260 = vmatprep.subr.mxu0 0.0
    %v2261 = vand.u32 %v120, 4294901760
    %2262 = vmatpush1.msra.mxu0 %v2261
    %2263 = vmatprep.subr.mxu0 0.0
    %v2264 = vand.u32 %v121, 4294901760
    %2265 = vmatpush1.msra.mxu0 %v2264
    %2266 = vmatprep.subr.mxu0 0.0
    %v2267 = vand.u32 %v122, 4294901760
    %2268 = vmatpush1.msra.mxu0 %v2267
    %2269 = vmatprep.subr.mxu0 0.0
    %2270 = vmatpush1.msra.mxu0 0.0
    %2271 = vmatprep.subr.mxu0 0.0
    %2272 = vmatpush1.msra.mxu0 0.0
    %2273 = vmatprep.subr.mxu0 0.0
    %2274 = vmatpush1.msra.mxu0 0.0
    %2275 = vmatprep.subr.mxu0 0.0
    %2276 = vmatpush1.msra.mxu0 0.0
    %2277 = vmatprep.subr.mxu0 0.0
    %2278 = vmatpush1.msra.mxu0 0.0
    %2279 = vmatprep.subr.mxu0 0.0
    %2280 = vmatpush1.msra.mxu0 0.0
    %2281 = vmatprep.subr.mxu0 0.0
    %2282 = vmatpush1.msra.mxu0 0.0
    %2283 = vmatprep.subr.mxu0 0.0
    %2284 = vmatpush1.msra.mxu0 0.0
    %2285 = vmatprep.subr.mxu0 0.0
    %2286 = vmatpush1.msra.mxu0 0.0
    %2287 = vmatprep.subr.mxu0 0.0
    %2288 = vmatpush1.msra.mxu0 0.0
    %2289 = vmatprep.subr.mxu0 0.0
    %2290 = vmatpush1.msra.mxu0 0.0
    %2291 = vmatprep.subr.mxu0 0.0
    %2292 = vmatpush1.msra.mxu0 0.0
    %2293 = vmatprep.subr.mxu0 0.0
    %2294 = vmatpush1.msra.mxu0 0.0
    %2295 = vmatprep.subr.mxu0 0.0
    %2296 = vmatpush1.msra.mxu0 0.0
    %2297 = vmatprep.subr.mxu0 0.0
    %2298 = vmatpush1.msra.mxu0 0.0
    %2299 = vmatprep.subr.mxu0 0.0
    %2300 = vmatpush1.msra.mxu0 0.0
    %2301 = vmatprep.mubr.f32.mxu0 0.0
    %v2302 = vand.u32 %v145, 4294901760
    %v2303 = vsub.f32 %v145, %v2302
    %v2304 = vand.u32 %v2303, 4294901760
    %2305 = vmatmul.mubr.f32.gmra.mrb[0].mxu0 %v2304
    %v2306 = vpop.f32.mrb[0].mxu0
    %v2307 = vadd.f32 %v2218, %v2306
    %v2308 = vpop.f32.mrb[0].mxu0
    %2309 = vdwg.mxu0
    %2310 = vmatprep.subr.mxu0 0.0
    %v2311 = vand.u32 %v107, 4294901760
    %v2312 = vsub.f32 %v107, %v2311
    %v2313 = vand.u32 %v2312, 4294901760
    %2314 = vmatpush1.msra.mxu0 %v2313
    %2315 = vmatprep.subr.mxu0 0.0
    %v2316 = vand.u32 %v108, 4294901760
    %v2317 = vsub.f32 %v108, %v2316
    %v2318 = vand.u32 %v2317, 4294901760
    %2319 = vmatpush1.msra.mxu0 %v2318
    %2320 = vmatprep.subr.mxu0 0.0
    %v2321 = vand.u32 %v109, 4294901760
    %v2322 = vsub.f32 %v109, %v2321
    %v2323 = vand.u32 %v2322, 4294901760
    %2324 = vmatpush1.msra.mxu0 %v2323
    %2325 = vmatprep.subr.mxu0 0.0
    %v2326 = vand.u32 %v110, 4294901760
    %v2327 = vsub.f32 %v110, %v2326
    %v2328 = vand.u32 %v2327, 4294901760
    %2329 = vmatpush1.msra.mxu0 %v2328
    %2330 = vmatprep.subr.mxu0 0.0
    %v2331 = vand.u32 %v111, 4294901760
    %v2332 = vsub.f32 %v111, %v2331
    %v2333 = vand.u32 %v2332, 4294901760
    %2334 = vmatpush1.msra.mxu0 %v2333
    %2335 = vmatprep.subr.mxu0 0.0
    %v2336 = vand.u32 %v112, 4294901760
    %v2337 = vsub.f32 %v112, %v2336
    %v2338 = vand.u32 %v2337, 4294901760
    %2339 = vmatpush1.msra.mxu0 %v2338
    %2340 = vmatprep.subr.mxu0 0.0
    %v2341 = vand.u32 %v113, 4294901760
    %v2342 = vsub.f32 %v113, %v2341
    %v2343 = vand.u32 %v2342, 4294901760
    %2344 = vmatpush1.msra.mxu0 %v2343
    %2345 = vmatprep.subr.mxu0 0.0
    %v2346 = vand.u32 %v114, 4294901760
    %v2347 = vsub.f32 %v114, %v2346
    %v2348 = vand.u32 %v2347, 4294901760
    %2349 = vmatpush1.msra.mxu0 %v2348
    %2350 = vmatprep.subr.mxu0 0.0
    %v2351 = vand.u32 %v115, 4294901760
    %v2352 = vsub.f32 %v115, %v2351
    %v2353 = vand.u32 %v2352, 4294901760
    %2354 = vmatpush1.msra.mxu0 %v2353
    %2355 = vmatprep.subr.mxu0 0.0
    %v2356 = vand.u32 %v116, 4294901760
    %v2357 = vsub.f32 %v116, %v2356
    %v2358 = vand.u32 %v2357, 4294901760
    %2359 = vmatpush1.msra.mxu0 %v2358
    %2360 = vmatprep.subr.mxu0 0.0
    %v2361 = vand.u32 %v117, 4294901760
    %v2362 = vsub.f32 %v117, %v2361
    %v2363 = vand.u32 %v2362, 4294901760
    %2364 = vmatpush1.msra.mxu0 %v2363
    %2365 = vmatprep.subr.mxu0 0.0
    %v2366 = vand.u32 %v118, 4294901760
    %v2367 = vsub.f32 %v118, %v2366
    %v2368 = vand.u32 %v2367, 4294901760
    %2369 = vmatpush1.msra.mxu0 %v2368
    %2370 = vmatprep.subr.mxu0 0.0
    %v2371 = vand.u32 %v119, 4294901760
    %v2372 = vsub.f32 %v119, %v2371
    %v2373 = vand.u32 %v2372, 4294901760
    %2374 = vmatpush1.msra.mxu0 %v2373
    %2375 = vmatprep.subr.mxu0 0.0
    %v2376 = vand.u32 %v120, 4294901760
    %v2377 = vsub.f32 %v120, %v2376
    %v2378 = vand.u32 %v2377, 4294901760
    %2379 = vmatpush1.msra.mxu0 %v2378
    %2380 = vmatprep.subr.mxu0 0.0
    %v2381 = vand.u32 %v121, 4294901760
    %v2382 = vsub.f32 %v121, %v2381
    %v2383 = vand.u32 %v2382, 4294901760
    %2384 = vmatpush1.msra.mxu0 %v2383
    %2385 = vmatprep.subr.mxu0 0.0
    %v2386 = vand.u32 %v122, 4294901760
    %v2387 = vsub.f32 %v122, %v2386
    %v2388 = vand.u32 %v2387, 4294901760
    %2389 = vmatpush1.msra.mxu0 %v2388
    %2390 = vmatprep.subr.mxu0 0.0
    %2391 = vmatpush1.msra.mxu0 0.0
    %2392 = vmatprep.subr.mxu0 0.0
    %2393 = vmatpush1.msra.mxu0 0.0
    %2394 = vmatprep.subr.mxu0 0.0
    %2395 = vmatpush1.msra.mxu0 0.0
    %2396 = vmatprep.subr.mxu0 0.0
    %2397 = vmatpush1.msra.mxu0 0.0
    %2398 = vmatprep.subr.mxu0 0.0
    %2399 = vmatpush1.msra.mxu0 0.0
    %2400 = vmatprep.subr.mxu0 0.0
    %2401 = vmatpush1.msra.mxu0 0.0
    %2402 = vmatprep.subr.mxu0 0.0
    %2403 = vmatpush1.msra.mxu0 0.0
    %2404 = vmatprep.subr.mxu0 0.0
    %2405 = vmatpush1.msra.mxu0 0.0
    %2406 = vmatprep.subr.mxu0 0.0
    %2407 = vmatpush1.msra.mxu0 0.0
    %2408 = vmatprep.subr.mxu0 0.0
    %2409 = vmatpush1.msra.mxu0 0.0
    %2410 = vmatprep.subr.mxu0 0.0
    %2411 = vmatpush1.msra.mxu0 0.0
    %2412 = vmatprep.subr.mxu0 0.0
    %2413 = vmatpush1.msra.mxu0 0.0
    %2414 = vmatprep.subr.mxu0 0.0
    %2415 = vmatpush1.msra.mxu0 0.0
    %2416 = vmatprep.subr.mxu0 0.0
    %2417 = vmatpush1.msra.mxu0 0.0
    %2418 = vmatprep.subr.mxu0 0.0
    %2419 = vmatpush1.msra.mxu0 0.0
    %2420 = vmatprep.subr.mxu0 0.0
    %2421 = vmatpush1.msra.mxu0 0.0
    %2422 = vmatprep.mubr.f32.mxu0 0.0
    %v2423 = vand.u32 %v145, 4294901760
    %2424 = vmatmul.mubr.f32.gmra.mrb[0].mxu0 %v2423
    %v2425 = vpop.f32.mrb[0].mxu0
    %v2426 = vadd.f32 %v2307, %v2425
    %v2427 = vpop.f32.mrb[0].mxu0
    %2428 = vdwg.mxu0
    %2429 = vmatprep.subr.mxu0 0.0
    %v2430 = vand.u32 %v107, 4294901760
    %2431 = vmatpush1.msra.mxu0 %v2430
    %2432 = vmatprep.subr.mxu0 0.0
    %v2433 = vand.u32 %v108, 4294901760
    %2434 = vmatpush1.msra.mxu0 %v2433
    %2435 = vmatprep.subr.mxu0 0.0
    %v2436 = vand.u32 %v109, 4294901760
    %2437 = vmatpush1.msra.mxu0 %v2436
    %2438 = vmatprep.subr.mxu0 0.0
    %v2439 = vand.u32 %v110, 4294901760
    %2440 = vmatpush1.msra.mxu0 %v2439
    %2441 = vmatprep.subr.mxu0 0.0
    %v2442 = vand.u32 %v111, 4294901760
    %2443 = vmatpush1.msra.mxu0 %v2442
    %2444 = vmatprep.subr.mxu0 0.0
    %v2445 = vand.u32 %v112, 4294901760
    %2446 = vmatpush1.msra.mxu0 %v2445
    %2447 = vmatprep.subr.mxu0 0.0
    %v2448 = vand.u32 %v113, 4294901760
    %2449 = vmatpush1.msra.mxu0 %v2448
    %2450 = vmatprep.subr.mxu0 0.0
    %v2451 = vand.u32 %v114, 4294901760
    %2452 = vmatpush1.msra.mxu0 %v2451
    %2453 = vmatprep.subr.mxu0 0.0
    %v2454 = vand.u32 %v115, 4294901760
    %2455 = vmatpush1.msra.mxu0 %v2454
    %2456 = vmatprep.subr.mxu0 0.0
    %v2457 = vand.u32 %v116, 4294901760
    %2458 = vmatpush1.msra.mxu0 %v2457
    %2459 = vmatprep.subr.mxu0 0.0
    %v2460 = vand.u32 %v117, 4294901760
    %2461 = vmatpush1.msra.mxu0 %v2460
    %2462 = vmatprep.subr.mxu0 0.0
    %v2463 = vand.u32 %v118, 4294901760
    %2464 = vmatpush1.msra.mxu0 %v2463
    %2465 = vmatprep.subr.mxu0 0.0
    %v2466 = vand.u32 %v119, 4294901760
    %2467 = vmatpush1.msra.mxu0 %v2466
    %2468 = vmatprep.subr.mxu0 0.0
    %v2469 = vand.u32 %v120, 4294901760
    %2470 = vmatpush1.msra.mxu0 %v2469
    %2471 = vmatprep.subr.mxu0 0.0
    %v2472 = vand.u32 %v121, 4294901760
    %2473 = vmatpush1.msra.mxu0 %v2472
    %2474 = vmatprep.subr.mxu0 0.0
    %v2475 = vand.u32 %v122, 4294901760
    %2476 = vmatpush1.msra.mxu0 %v2475
    %2477 = vmatprep.subr.mxu0 0.0
    %2478 = vmatpush1.msra.mxu0 0.0
    %2479 = vmatprep.subr.mxu0 0.0
    %2480 = vmatpush1.msra.mxu0 0.0
    %2481 = vmatprep.subr.mxu0 0.0
    %2482 = vmatpush1.msra.mxu0 0.0
    %2483 = vmatprep.subr.mxu0 0.0
    %2484 = vmatpush1.msra.mxu0 0.0
    %2485 = vmatprep.subr.mxu0 0.0
    %2486 = vmatpush1.msra.mxu0 0.0
    %2487 = vmatprep.subr.mxu0 0.0
    %2488 = vmatpush1.msra.mxu0 0.0
    %2489 = vmatprep.subr.mxu0 0.0
    %2490 = vmatpush1.msra.mxu0 0.0
    %2491 = vmatprep.subr.mxu0 0.0
    %2492 = vmatpush1.msra.mxu0 0.0
    %2493 = vmatprep.subr.mxu0 0.0
    %2494 = vmatpush1.msra.mxu0 0.0
    %2495 = vmatprep.subr.mxu0 0.0
    %2496 = vmatpush1.msra.mxu0 0.0
    %2497 = vmatprep.subr.mxu0 0.0
    %2498 = vmatpush1.msra.mxu0 0.0
    %2499 = vmatprep.subr.mxu0 0.0
    %2500 = vmatpush1.msra.mxu0 0.0
    %2501 = vmatprep.subr.mxu0 0.0
    %2502 = vmatpush1.msra.mxu0 0.0
    %2503 = vmatprep.subr.mxu0 0.0
    %2504 = vmatpush1.msra.mxu0 0.0
    %2505 = vmatprep.subr.mxu0 0.0
    %2506 = vmatpush1.msra.mxu0 0.0
    %2507 = vmatprep.subr.mxu0 0.0
    %2508 = vmatpush1.msra.mxu0 0.0
    %2509 = vmatprep.mubr.f32.mxu0 0.0
    %v2510 = vand.u32 %v145, 4294901760
    %2511 = vmatmul.mubr.f32.gmra.mrb[0].mxu0 %v2510
    %v2512 = vpop.f32.mrb[0].mxu0
    %v2513 = vadd.f32 %v2426, %v2512
    %v2514 = vpop.f32.mrb[0].mxu0
    %2515 = vdwg.mxu0
    %2516 = vst [vmem:[#allocation8] sm:$0x1] %v2513
    // Predicated region
    $region22: #{tpu_custom_call.1} parent=1 // pred_check
      _
    $region23: #{tpu_custom_call.1} parent=1 // pred_check_branch
      %2518 = sbr.rel (0) target = $region25
    $region24: #{tpu_custom_call.1} parent=1 // pred_region
      %s2520 = ssub.s32 16, 16
      %2521 = vsyncadd [#allocation5], %s2520
      %s2523 = sshll.u32 [#allocation8], 4
      %s2524 = int_to_ptr.vmem [resolvable:$true] %s2523
      %2526 = dma.vmem_to_hbm [thread:$0]  %s2524, 16, %s3, [#allocation5]
    $region25: #{tpu_custom_call.1} parent=1 // pred_fallthru
      _
    // Predicated region
    $region26: #{tpu_custom_call.1} parent=1 // pred_check
      _
    $region27: #{tpu_custom_call.1} parent=1 // pred_check_branch
      %2528 = sbr.rel (0) target = $region29
    $region28: #{tpu_custom_call.1} parent=1 // pred_region
      %2529 = dma.done [#allocation5], 16
    $region29: #{tpu_custom_call.1} parent=1 // pred_fallthru
      _
    %2530 = vsyncpa [#allocation4], 1
    %2531 = vsyncpa [#allocation7], 1
    %2532 = vsyncpa [#allocation5], 1

</llo_original>
